<compile_context>
chip_gen: v7x
topology: tpu7x:2x2x1
jax: 0.10.0
libtpu: 0.0.40
codegen_flags: <defaults>
</compile_context>

<pallas_src>
import functools

import jax
import jax.numpy as jnp
from jax.experimental import pallas as pl
from jax.experimental.pallas import tpu as pltpu


# ----------------------------- Pallas kernel -------------------------------

def make_fused_forward_kernel(n_layers, T, B):
    """Builds the fused forward kernel for a fixed (n_layers, T, B).

    Ref layout (all VMEM, whole-array):
      inputs : x_flat (T*B, E)  [time-major, flattened],
               per layer: wih (D_in, 4H), whh (H, 4H), b (1, 4H),
               h0 (L, B, H), c0 (L, B, H), w_fc (H, O), b_fc (1, O)
      outputs: out (B, O), hT (L, B, H), cT (L, B, H)
      scratch: seq (T*B, H)    [only when n_layers > 1]
    """

    def kernel(x_ref, *refs):
        idx = 0
        layer_refs = []
        for _ in range(n_layers):
            layer_refs.append((refs[idx], refs[idx + 1], refs[idx + 2]))
            idx += 3
        h0_ref, c0_ref, wfc_ref, bfc_ref = refs[idx:idx + 4]
        idx += 4
        out_ref, hT_ref, cT_ref = refs[idx:idx + 3]
        idx += 3
        seq_ref = refs[idx] if n_layers > 1 else None

        H = h0_ref.shape[-1]

        inp_flat = x_ref[...]                        # (T*B, D_in), time-major rows
        h = None
        for l, (wih_ref, whh_ref, b_ref) in enumerate(layer_refs):
            # Hoisted input projection: one lane-dense (T*B, 4H) matmul, bias added once.
            xw = jnp.dot(inp_flat, wih_ref[...],
                         preferred_element_type=jnp.float32) + b_ref[...]
            whh = whh_ref[...]                       # (H, 4H), loaded once per layer
            h = h0_ref[l]                            # (B, H)
            c = c0_ref[l]                            # (B, H)
            last_layer = (l == n_layers - 1)
            # T is small and static -> unrolled loop (good LLO visibility).
            for t in range(T):
                gates = xw[t * B:(t + 1) * B, :] + jnp.dot(
                    h, whh, preferred_element_type=jnp.float32)   # (B, 4H)
                sg = jax.nn.sigmoid(gates)           # one EUP pass over the full gate tile
                i = sg[:, 0:H]
                f = sg[:, H:2 * H]
                o = sg[:, 3 * H:4 * H]
                g = jnp.tanh(gates[:, 2 * H:3 * H])
                c = f * c + i * g
                h = o * jnp.tanh(c)
                if not last_layer:
                    # Stash next layer's input (time-major flattened), stays on-chip.
                    seq_ref[t * B:(t + 1) * B, :] = h
            hT_ref[l] = h
            cT_ref[l] = c
            if not last_layer:
                inp_flat = seq_ref[...]              # (T*B, H)

        # Dropout is identity in eval mode.
        # TODO(synk): training-mode dropout would need pltpu.prng_seed/prng_random_bits masking.
        # FC + Sigmoid only on the last timestep's hidden state of the last layer.
        z = jnp.dot(h, wfc_ref[...], preferred_element_type=jnp.float32) + bfc_ref[...]
        out_ref[...] = jax.nn.sigmoid(z)             # (B, O)

    return kernel


# ------------------------------ JAX wrappers -------------------------------

_VMEM_SPEC = pl.BlockSpec(memory_space=pltpu.MemorySpace.VMEM)


def init_params(key, vocab_size, embedding_dim, hidden_dim, n_layers, output_dim):
    """Deterministic synthetic parameters (matches PyTorch module shapes),
    repacked into the fused kernel layout."""
    keys = iter(jax.random.split(key, 4 * n_layers + 3))
    H = hidden_dim
    params = {
        "embedding": jax.random.normal(next(keys), (vocab_size, embedding_dim),
                                       jnp.float32),
        "wih": [], "whh": [], "b": [],
    }
    bound = 1.0 / jnp.sqrt(jnp.float32(H))
    for layer in range(n_layers):
        d_in = embedding_dim if layer == 0 else hidden_dim
        # PyTorch layout: weight_ih (4H, d_in), weight_hh (4H, H), gate order [i,f,g,o].
        w_ih = jax.random.uniform(next(keys), (4 * H, d_in), jnp.float32, -bound, bound)
        w_hh = jax.random.uniform(next(keys), (4 * H, H), jnp.float32, -bound, bound)
        b_ih = jax.random.uniform(next(keys), (4 * H,), jnp.float32, -bound, bound)
        b_hh = jax.random.uniform(next(keys), (4 * H,), jnp.float32, -bound, bound)
        # Fused repack: (d_in, 4H), (H, 4H), (1, 4H); column blocks stay in [i|f|g|o] order.
        params["wih"].append(w_ih.T)
        params["whh"].append(w_hh.T)
        params["b"].append((b_ih + b_hh).reshape(1, 4 * H))
    # Linear(H -> output_dim): torch weight (O, H) -> kernel uses (H, O).
    fb = 1.0 / jnp.sqrt(jnp.float32(H))
    w_fc = jax.random.uniform(next(keys), (output_dim, H), jnp.float32, -fb, fb)
    b_fc = jax.random.uniform(next(keys), (output_dim,), jnp.float32, -fb, fb)
    params["w_fc"] = w_fc.T
    params["b_fc"] = b_fc.reshape(1, output_dim)
    return params


def sentiment_lstm_forward(params, x_ids, hidden, *, n_layers, hidden_dim):
    """Forward pass equivalent to SentimentLSTM.forward (inference / eval mode)."""
    h0_all, c0_all = hidden                          # each (L, B, H)
    B, T = x_ids.shape
    H = hidden_dim
    O = params["w_fc"].shape[-1]

    # Embedding lookup (glue, plain JAX gather): (B, T) -> (B, T, E).
    embeds = jnp.take(params["embedding"], x_ids, axis=0)
    # Time-major, flattened to (T*B, E) so the kernel's hoisted input projection
    # is a single lane-dense 2-D matmul.
    E = embeds.shape[-1]
    x_flat = jnp.transpose(embeds, (1, 0, 2)).reshape(T * B, E)

    kernel = make_fused_forward_kernel(n_layers, T, B)
    args = [x_flat]
    for l in range(n_layers):
        args += [params["wih"][l], params["whh"][l], params["b"][l]]
    args += [h0_all, c0_all, params["w_fc"], params["b_fc"]]

    scratch_shapes = []
    if n_layers > 1:
        scratch_shapes.append(pltpu.VMEM((T * B, H), jnp.float32))

    out, h_n, c_n = pl.pallas_call(
        kernel,
        out_shape=(jax.ShapeDtypeStruct((B, O), jnp.float32),
                   jax.ShapeDtypeStruct((n_layers, B, H), jnp.float32),
                   jax.ShapeDtypeStruct((n_layers, B, H), jnp.float32)),
        in_specs=[_VMEM_SPEC] * len(args),
        out_specs=(_VMEM_SPEC, _VMEM_SPEC, _VMEM_SPEC),
        scratch_shapes=scratch_shapes,
    )(*args)

    # Matches sigmoid(fc(all steps)).view(B, -1)[:, -1] of the torch reference
    # (last timestep, last output dim).
    sig_out = out[:, -1]
    return sig_out, (h_n, c_n)


# ---------------------------------- main -----------------------------------

if __name__ == "__main__":
    # Small, module-consistent config. hidden_dim=32 -> fused gate width 4H=128 (lane-dense).
    vocab_size = 100
    output_dim = 1
    embedding_dim = 16
    hidden_dim = 32
    n_layers = 2
    batch_size = 2
    seq_len = 8

    key = jax.random.PRNGKey(0)
    k_params, k_x = jax.random.split(key)

    params = init_params(k_params, vocab_size, embedding_dim, hidden_dim,
                         n_layers, output_dim)

    # Token ids (B, T) and zero-initialized hidden state, like init_hidden().
    x_ids = jax.random.randint(k_x, (batch_size, seq_len), 0, vocab_size, jnp.int32)
    h0 = jnp.zeros((n_layers, batch_size, hidden_dim), jnp.float32)
    c0 = jnp.zeros((n_layers, batch_size, hidden_dim), jnp.float32)

    fwd = jax.jit(functools.partial(sentiment_lstm_forward,
                                    n_layers=n_layers, hidden_dim=hidden_dim))
    sig_out, (h_n, c_n) = fwd(params, x_ids, (h0, c0))
    jax.block_until_ready((sig_out, h_n, c_n))

    assert sig_out.shape == (batch_size,)
    assert h_n.shape == (n_layers, batch_size, hidden_dim)
    assert c_n.shape == (n_layers, batch_size, hidden_dim)
    print("KERNEL_OK")
</pallas_src>

<mosaic_0001>
module attributes {stable_mosaic.version = 11 : i64} {
  func.func @kernel(%arg0: memref<16x16xf32, #tpu.memory_space<vmem>>, %arg1: memref<16x128xf32, #tpu.memory_space<vmem>>, %arg2: memref<32x128xf32, #tpu.memory_space<vmem>>, %arg3: memref<1x128xf32, #tpu.memory_space<vmem>>, %arg4: memref<32x128xf32, #tpu.memory_space<vmem>>, %arg5: memref<32x128xf32, #tpu.memory_space<vmem>>, %arg6: memref<1x128xf32, #tpu.memory_space<vmem>>, %arg7: memref<2x2x32xf32, #tpu.memory_space<vmem>>, %arg8: memref<2x2x32xf32, #tpu.memory_space<vmem>>, %arg9: memref<32x1xf32, #tpu.memory_space<vmem>>, %arg10: memref<1x1xf32, #tpu.memory_space<vmem>>, %arg11: memref<2x1xf32, #tpu.memory_space<vmem>>, %arg12: memref<2x2x32xf32, #tpu.memory_space<vmem>>, %arg13: memref<2x2x32xf32, #tpu.memory_space<vmem>>, %arg14: memref<16x32xf32, #tpu.memory_space<vmem>>) attributes {dimension_semantics = [], scalar_prefetch = 0 : i64, scratch_operands = 1 : i64, tpu.core_type = #tpu.core_type<tc>} {
    %c0 = arith.constant 0 : index
    %c0_0 = arith.constant 0 : index
    %0 = vector.load %arg0[%c0, %c0_0] : memref<16x16xf32, #tpu.memory_space<vmem>>, vector<16x16xf32>
    %c0_1 = arith.constant 0 : index
    %c0_2 = arith.constant 0 : index
    %1 = vector.load %arg1[%c0_1, %c0_2] : memref<16x128xf32, #tpu.memory_space<vmem>>, vector<16x128xf32>
    %cst = arith.constant dense<0.000000e+00> : vector<16x128xf32>
    %2 = tpu.matmul %0, %1, %cst {dimension_numbers = #tpu.dot_dimension_numbers<[1], [0], [0], [1], [0, 0, 1, 1], [], []>} : vector<16x16xf32>, vector<16x128xf32>, vector<16x128xf32> -> vector<16x128xf32>
    %c0_3 = arith.constant 0 : index
    %c0_4 = arith.constant 0 : index
    %3 = vector.load %arg3[%c0_3, %c0_4] : memref<1x128xf32, #tpu.memory_space<vmem>>, vector<1x128xf32>
    %4 = vector.broadcast %3 : vector<1x128xf32> to vector<16x128xf32>
    %5 = arith.addf %2, %4 : vector<16x128xf32>
    %c0_5 = arith.constant 0 : index
    %c0_6 = arith.constant 0 : index
    %6 = vector.load %arg2[%c0_5, %c0_6] : memref<32x128xf32, #tpu.memory_space<vmem>>, vector<32x128xf32>
    %c0_7 = arith.constant 0 : index
    %c0_8 = arith.constant 0 : index
    %c0_9 = arith.constant 0 : index
    %7 = vector.load %arg7[%c0_7, %c0_8, %c0_9] : memref<2x2x32xf32, #tpu.memory_space<vmem>>, vector<1x2x32xf32>
    %8 = vector.shape_cast %7 : vector<1x2x32xf32> to vector<2x32xf32>
    %c0_10 = arith.constant 0 : index
    %c0_11 = arith.constant 0 : index
    %c0_12 = arith.constant 0 : index
    %9 = vector.load %arg8[%c0_10, %c0_11, %c0_12] : memref<2x2x32xf32, #tpu.memory_space<vmem>>, vector<1x2x32xf32>
    %10 = vector.shape_cast %9 : vector<1x2x32xf32> to vector<2x32xf32>
    %11 = vector.extract_strided_slice %5 {offsets = [0, 0], sizes = [2, 128], strides = [1, 1]} : vector<16x128xf32> to vector<2x128xf32>
    %cst_13 = arith.constant dense<0.000000e+00> : vector<2x128xf32>
    %12 = tpu.matmul %8, %6, %cst_13 {dimension_numbers = #tpu.dot_dimension_numbers<[1], [0], [0], [1], [0, 0, 1, 1], [], []>} : vector<2x32xf32>, vector<32x128xf32>, vector<2x128xf32> -> vector<2x128xf32>
    %13 = arith.addf %11, %12 : vector<2x128xf32>
    %14 = arith.negf %13 : vector<2x128xf32>
    %15 = math.exp %14 : vector<2x128xf32>
    %cst_14 = arith.constant 1.000000e+00 : f32
    %16 = vector.broadcast %cst_14 : f32 to vector<2x128xf32>
    %17 = arith.addf %16, %15 : vector<2x128xf32>
    %18 = arith.divf %16, %17 : vector<2x128xf32>
    %19 = vector.extract_strided_slice %18 {offsets = [0, 0], sizes = [2, 32], strides = [1, 1]} : vector<2x128xf32> to vector<2x32xf32>
    %20 = vector.extract_strided_slice %18 {offsets = [0, 32], sizes = [2, 32], strides = [1, 1]} : vector<2x128xf32> to vector<2x32xf32>
    %21 = vector.extract_strided_slice %18 {offsets = [0, 96], sizes = [2, 32], strides = [1, 1]} : vector<2x128xf32> to vector<2x32xf32>
    %22 = vector.extract_strided_slice %13 {offsets = [0, 64], sizes = [2, 32], strides = [1, 1]} : vector<2x128xf32> to vector<2x32xf32>
    %23 = math.tanh %22 : vector<2x32xf32>
    %24 = arith.mulf %20, %10 : vector<2x32xf32>
    %25 = arith.mulf %19, %23 : vector<2x32xf32>
    %26 = arith.addf %24, %25 : vector<2x32xf32>
    %27 = math.tanh %26 : vector<2x32xf32>
    %28 = arith.mulf %21, %27 : vector<2x32xf32>
    %c0_15 = arith.constant 0 : index
    %c0_16 = arith.constant 0 : index
    %29 = vector.load %arg14[%c0_15, %c0_16] : memref<16x32xf32, #tpu.memory_space<vmem>>, vector<2x32xf32>
    tpu.vector_store %arg14[%c0_15, %c0_16], %28 {strides = array<i32>} : memref<16x32xf32, #tpu.memory_space<vmem>>, vector<2x32xf32>,
    %30 = vector.extract_strided_slice %5 {offsets = [2, 0], sizes = [2, 128], strides = [1, 1]} : vector<16x128xf32> to vector<2x128xf32>
    %cst_17 = arith.constant dense<0.000000e+00> : vector<2x128xf32>
    %31 = tpu.matmul %28, %6, %cst_17 {dimension_numbers = #tpu.dot_dimension_numbers<[1], [0], [0], [1], [0, 0, 1, 1], [], []>} : vector<2x32xf32>, vector<32x128xf32>, vector<2x128xf32> -> vector<2x128xf32>
    %32 = arith.addf %30, %31 : vector<2x128xf32>
    %33 = arith.negf %32 : vector<2x128xf32>
    %34 = math.exp %33 : vector<2x128xf32>
    %cst_18 = arith.constant 1.000000e+00 : f32
    %35 = vector.broadcast %cst_18 : f32 to vector<2x128xf32>
    %36 = arith.addf %35, %34 : vector<2x128xf32>
    %37 = arith.divf %35, %36 : vector<2x128xf32>
    %38 = vector.extract_strided_slice %37 {offsets = [0, 0], sizes = [2, 32], strides = [1, 1]} : vector<2x128xf32> to vector<2x32xf32>
    %39 = vector.extract_strided_slice %37 {offsets = [0, 32], sizes = [2, 32], strides = [1, 1]} : vector<2x128xf32> to vector<2x32xf32>
    %40 = vector.extract_strided_slice %37 {offsets = [0, 96], sizes = [2, 32], strides = [1, 1]} : vector<2x128xf32> to vector<2x32xf32>
    %41 = vector.extract_strided_slice %32 {offsets = [0, 64], sizes = [2, 32], strides = [1, 1]} : vector<2x128xf32> to vector<2x32xf32>
    %42 = math.tanh %41 : vector<2x32xf32>
    %43 = arith.mulf %39, %26 : vector<2x32xf32>
    %44 = arith.mulf %38, %42 : vector<2x32xf32>
    %45 = arith.addf %43, %44 : vector<2x32xf32>
    %46 = math.tanh %45 : vector<2x32xf32>
    %47 = arith.mulf %40, %46 : vector<2x32xf32>
    %c2 = arith.constant 2 : index
    %c0_19 = arith.constant 0 : index
    %48 = vector.load %arg14[%c2, %c0_19] : memref<16x32xf32, #tpu.memory_space<vmem>>, vector<2x32xf32>
    tpu.vector_store %arg14[%c2, %c0_19], %47 {strides = array<i32>} : memref<16x32xf32, #tpu.memory_space<vmem>>, vector<2x32xf32>,
    %49 = vector.extract_strided_slice %5 {offsets = [4, 0], sizes = [2, 128], strides = [1, 1]} : vector<16x128xf32> to vector<2x128xf32>
    %cst_20 = arith.constant dense<0.000000e+00> : vector<2x128xf32>
    %50 = tpu.matmul %47, %6, %cst_20 {dimension_numbers = #tpu.dot_dimension_numbers<[1], [0], [0], [1], [0, 0, 1, 1], [], []>} : vector<2x32xf32>, vector<32x128xf32>, vector<2x128xf32> -> vector<2x128xf32>
    %51 = arith.addf %49, %50 : vector<2x128xf32>
    %52 = arith.negf %51 : vector<2x128xf32>
    %53 = math.exp %52 : vector<2x128xf32>
    %cst_21 = arith.constant 1.000000e+00 : f32
    %54 = vector.broadcast %cst_21 : f32 to vector<2x128xf32>
    %55 = arith.addf %54, %53 : vector<2x128xf32>
    %56 = arith.divf %54, %55 : vector<2x128xf32>
    %57 = vector.extract_strided_slice %56 {offsets = [0, 0], sizes = [2, 32], strides = [1, 1]} : vector<2x128xf32> to vector<2x32xf32>
    %58 = vector.extract_strided_slice %56 {offsets = [0, 32], sizes = [2, 32], strides = [1, 1]} : vector<2x128xf32> to vector<2x32xf32>
    %59 = vector.extract_strided_slice %56 {offsets = [0, 96], sizes = [2, 32], strides = [1, 1]} : vector<2x128xf32> to vector<2x32xf32>
    %60 = vector.extract_strided_slice %51 {offsets = [0, 64], sizes = [2, 32], strides = [1, 1]} : vector<2x128xf32> to vector<2x32xf32>
    %61 = math.tanh %60 : vector<2x32xf32>
    %62 = arith.mulf %58, %45 : vector<2x32xf32>
    %63 = arith.mulf %57, %61 : vector<2x32xf32>
    %64 = arith.addf %62, %63 : vector<2x32xf32>
    %65 = math.tanh %64 : vector<2x32xf32>
    %66 = arith.mulf %59, %65 : vector<2x32xf32>
    %c4 = arith.constant 4 : index
    %c0_22 = arith.constant 0 : index
    %67 = vector.load %arg14[%c4, %c0_22] : memref<16x32xf32, #tpu.memory_space<vmem>>, vector<2x32xf32>
    tpu.vector_store %arg14[%c4, %c0_22], %66 {strides = array<i32>} : memref<16x32xf32, #tpu.memory_space<vmem>>, vector<2x32xf32>,
    %68 = vector.extract_strided_slice %5 {offsets = [6, 0], sizes = [2, 128], strides = [1, 1]} : vector<16x128xf32> to vector<2x128xf32>
    %cst_23 = arith.constant dense<0.000000e+00> : vector<2x128xf32>
    %69 = tpu.matmul %66, %6, %cst_23 {dimension_numbers = #tpu.dot_dimension_numbers<[1], [0], [0], [1], [0, 0, 1, 1], [], []>} : vector<2x32xf32>, vector<32x128xf32>, vector<2x128xf32> -> vector<2x128xf32>
    %70 = arith.addf %68, %69 : vector<2x128xf32>
    %71 = arith.negf %70 : vector<2x128xf32>
    %72 = math.exp %71 : vector<2x128xf32>
    %cst_24 = arith.constant 1.000000e+00 : f32
    %73 = vector.broadcast %cst_24 : f32 to vector<2x128xf32>
    %74 = arith.addf %73, %72 : vector<2x128xf32>
    %75 = arith.divf %73, %74 : vector<2x128xf32>
    %76 = vector.extract_strided_slice %75 {offsets = [0, 0], sizes = [2, 32], strides = [1, 1]} : vector<2x128xf32> to vector<2x32xf32>
    %77 = vector.extract_strided_slice %75 {offsets = [0, 32], sizes = [2, 32], strides = [1, 1]} : vector<2x128xf32> to vector<2x32xf32>
    %78 = vector.extract_strided_slice %75 {offsets = [0, 96], sizes = [2, 32], strides = [1, 1]} : vector<2x128xf32> to vector<2x32xf32>
    %79 = vector.extract_strided_slice %70 {offsets = [0, 64], sizes = [2, 32], strides = [1, 1]} : vector<2x128xf32> to vector<2x32xf32>
    %80 = math.tanh %79 : vector<2x32xf32>
    %81 = arith.mulf %77, %64 : vector<2x32xf32>
    %82 = arith.mulf %76, %80 : vector<2x32xf32>
    %83 = arith.addf %81, %82 : vector<2x32xf32>
    %84 = math.tanh %83 : vector<2x32xf32>
    %85 = arith.mulf %78, %84 : vector<2x32xf32>
    %c6 = arith.constant 6 : index
    %c0_25 = arith.constant 0 : index
    %86 = vector.load %arg14[%c6, %c0_25] : memref<16x32xf32, #tpu.memory_space<vmem>>, vector<2x32xf32>
    tpu.vector_store %arg14[%c6, %c0_25], %85 {strides = array<i32>} : memref<16x32xf32, #tpu.memory_space<vmem>>, vector<2x32xf32>,
    %87 = vector.extract_strided_slice %5 {offsets = [8, 0], sizes = [2, 128], strides = [1, 1]} : vector<16x128xf32> to vector<2x128xf32>
    %cst_26 = arith.constant dense<0.000000e+00> : vector<2x128xf32>
    %88 = tpu.matmul %85, %6, %cst_26 {dimension_numbers = #tpu.dot_dimension_numbers<[1], [0], [0], [1], [0, 0, 1, 1], [], []>} : vector<2x32xf32>, vector<32x128xf32>, vector<2x128xf32> -> vector<2x128xf32>
    %89 = arith.addf %87, %88 : vector<2x128xf32>
    %90 = arith.negf %89 : vector<2x128xf32>
    %91 = math.exp %90 : vector<2x128xf32>
    %cst_27 = arith.constant 1.000000e+00 : f32
    %92 = vector.broadcast %cst_27 : f32 to vector<2x128xf32>
    %93 = arith.addf %92, %91 : vector<2x128xf32>
    %94 = arith.divf %92, %93 : vector<2x128xf32>
    %95 = vector.extract_strided_slice %94 {offsets = [0, 0], sizes = [2, 32], strides = [1, 1]} : vector<2x128xf32> to vector<2x32xf32>
    %96 = vector.extract_strided_slice %94 {offsets = [0, 32], sizes = [2, 32], strides = [1, 1]} : vector<2x128xf32> to vector<2x32xf32>
    %97 = vector.extract_strided_slice %94 {offsets = [0, 96], sizes = [2, 32], strides = [1, 1]} : vector<2x128xf32> to vector<2x32xf32>
    %98 = vector.extract_strided_slice %89 {offsets = [0, 64], sizes = [2, 32], strides = [1, 1]} : vector<2x128xf32> to vector<2x32xf32>
    %99 = math.tanh %98 : vector<2x32xf32>
    %100 = arith.mulf %96, %83 : vector<2x32xf32>
    %101 = arith.mulf %95, %99 : vector<2x32xf32>
    %102 = arith.addf %100, %101 : vector<2x32xf32>
    %103 = math.tanh %102 : vector<2x32xf32>
    %104 = arith.mulf %97, %103 : vector<2x32xf32>
    %c8 = arith.constant 8 : index
    %c0_28 = arith.constant 0 : index
    %105 = vector.load %arg14[%c8, %c0_28] : memref<16x32xf32, #tpu.memory_space<vmem>>, vector<2x32xf32>
    tpu.vector_store %arg14[%c8, %c0_28], %104 {strides = array<i32>} : memref<16x32xf32, #tpu.memory_space<vmem>>, vector<2x32xf32>,
    %106 = vector.extract_strided_slice %5 {offsets = [10, 0], sizes = [2, 128], strides = [1, 1]} : vector<16x128xf32> to vector<2x128xf32>
    %cst_29 = arith.constant dense<0.000000e+00> : vector<2x128xf32>
    %107 = tpu.matmul %104, %6, %cst_29 {dimension_numbers = #tpu.dot_dimension_numbers<[1], [0], [0], [1], [0, 0, 1, 1], [], []>} : vector<2x32xf32>, vector<32x128xf32>, vector<2x128xf32> -> vector<2x128xf32>
    %108 = arith.addf %106, %107 : vector<2x128xf32>
    %109 = arith.negf %108 : vector<2x128xf32>
    %110 = math.exp %109 : vector<2x128xf32>
    %cst_30 = arith.constant 1.000000e+00 : f32
    %111 = vector.broadcast %cst_30 : f32 to vector<2x128xf32>
    %112 = arith.addf %111, %110 : vector<2x128xf32>
    %113 = arith.divf %111, %112 : vector<2x128xf32>
    %114 = vector.extract_strided_slice %113 {offsets = [0, 0], sizes = [2, 32], strides = [1, 1]} : vector<2x128xf32> to vector<2x32xf32>
    %115 = vector.extract_strided_slice %113 {offsets = [0, 32], sizes = [2, 32], strides = [1, 1]} : vector<2x128xf32> to vector<2x32xf32>
    %116 = vector.extract_strided_slice %113 {offsets = [0, 96], sizes = [2, 32], strides = [1, 1]} : vector<2x128xf32> to vector<2x32xf32>
    %117 = vector.extract_strided_slice %108 {offsets = [0, 64], sizes = [2, 32], strides = [1, 1]} : vector<2x128xf32> to vector<2x32xf32>
    %118 = math.tanh %117 : vector<2x32xf32>
    %119 = arith.mulf %115, %102 : vector<2x32xf32>
    %120 = arith.mulf %114, %118 : vector<2x32xf32>
    %121 = arith.addf %119, %120 : vector<2x32xf32>
    %122 = math.tanh %121 : vector<2x32xf32>
    %123 = arith.mulf %116, %122 : vector<2x32xf32>
    %c10 = arith.constant 10 : index
    %c0_31 = arith.constant 0 : index
    %124 = vector.load %arg14[%c10, %c0_31] : memref<16x32xf32, #tpu.memory_space<vmem>>, vector<2x32xf32>
    tpu.vector_store %arg14[%c10, %c0_31], %123 {strides = array<i32>} : memref<16x32xf32, #tpu.memory_space<vmem>>, vector<2x32xf32>,
    %125 = vector.extract_strided_slice %5 {offsets = [12, 0], sizes = [2, 128], strides = [1, 1]} : vector<16x128xf32> to vector<2x128xf32>
    %cst_32 = arith.constant dense<0.000000e+00> : vector<2x128xf32>
    %126 = tpu.matmul %123, %6, %cst_32 {dimension_numbers = #tpu.dot_dimension_numbers<[1], [0], [0], [1], [0, 0, 1, 1], [], []>} : vector<2x32xf32>, vector<32x128xf32>, vector<2x128xf32> -> vector<2x128xf32>
    %127 = arith.addf %125, %126 : vector<2x128xf32>
    %128 = arith.negf %127 : vector<2x128xf32>
    %129 = math.exp %128 : vector<2x128xf32>
    %cst_33 = arith.constant 1.000000e+00 : f32
    %130 = vector.broadcast %cst_33 : f32 to vector<2x128xf32>
    %131 = arith.addf %130, %129 : vector<2x128xf32>
    %132 = arith.divf %130, %131 : vector<2x128xf32>
    %133 = vector.extract_strided_slice %132 {offsets = [0, 0], sizes = [2, 32], strides = [1, 1]} : vector<2x128xf32> to vector<2x32xf32>
    %134 = vector.extract_strided_slice %132 {offsets = [0, 32], sizes = [2, 32], strides = [1, 1]} : vector<2x128xf32> to vector<2x32xf32>
    %135 = vector.extract_strided_slice %132 {offsets = [0, 96], sizes = [2, 32], strides = [1, 1]} : vector<2x128xf32> to vector<2x32xf32>
    %136 = vector.extract_strided_slice %127 {offsets = [0, 64], sizes = [2, 32], strides = [1, 1]} : vector<2x128xf32> to vector<2x32xf32>
    %137 = math.tanh %136 : vector<2x32xf32>
    %138 = arith.mulf %134, %121 : vector<2x32xf32>
    %139 = arith.mulf %133, %137 : vector<2x32xf32>
    %140 = arith.addf %138, %139 : vector<2x32xf32>
    %141 = math.tanh %140 : vector<2x32xf32>
    %142 = arith.mulf %135, %141 : vector<2x32xf32>
    %c12 = arith.constant 12 : index
    %c0_34 = arith.constant 0 : index
    %143 = vector.load %arg14[%c12, %c0_34] : memref<16x32xf32, #tpu.memory_space<vmem>>, vector<2x32xf32>
    tpu.vector_store %arg14[%c12, %c0_34], %142 {strides = array<i32>} : memref<16x32xf32, #tpu.memory_space<vmem>>, vector<2x32xf32>,
    %144 = vector.extract_strided_slice %5 {offsets = [14, 0], sizes = [2, 128], strides = [1, 1]} : vector<16x128xf32> to vector<2x128xf32>
    %cst_35 = arith.constant dense<0.000000e+00> : vector<2x128xf32>
    %145 = tpu.matmul %142, %6, %cst_35 {dimension_numbers = #tpu.dot_dimension_numbers<[1], [0], [0], [1], [0, 0, 1, 1], [], []>} : vector<2x32xf32>, vector<32x128xf32>, vector<2x128xf32> -> vector<2x128xf32>
    %146 = arith.addf %144, %145 : vector<2x128xf32>
    %147 = arith.negf %146 : vector<2x128xf32>
    %148 = math.exp %147 : vector<2x128xf32>
    %cst_36 = arith.constant 1.000000e+00 : f32
    %149 = vector.broadcast %cst_36 : f32 to vector<2x128xf32>
    %150 = arith.addf %149, %148 : vector<2x128xf32>
    %151 = arith.divf %149, %150 : vector<2x128xf32>
    %152 = vector.extract_strided_slice %151 {offsets = [0, 0], sizes = [2, 32], strides = [1, 1]} : vector<2x128xf32> to vector<2x32xf32>
    %153 = vector.extract_strided_slice %151 {offsets = [0, 32], sizes = [2, 32], strides = [1, 1]} : vector<2x128xf32> to vector<2x32xf32>
    %154 = vector.extract_strided_slice %151 {offsets = [0, 96], sizes = [2, 32], strides = [1, 1]} : vector<2x128xf32> to vector<2x32xf32>
    %155 = vector.extract_strided_slice %146 {offsets = [0, 64], sizes = [2, 32], strides = [1, 1]} : vector<2x128xf32> to vector<2x32xf32>
    %156 = math.tanh %155 : vector<2x32xf32>
    %157 = arith.mulf %153, %140 : vector<2x32xf32>
    %158 = arith.mulf %152, %156 : vector<2x32xf32>
    %159 = arith.addf %157, %158 : vector<2x32xf32>
    %160 = math.tanh %159 : vector<2x32xf32>
    %161 = arith.mulf %154, %160 : vector<2x32xf32>
    %c14 = arith.constant 14 : index
    %c0_37 = arith.constant 0 : index
    %162 = vector.load %arg14[%c14, %c0_37] : memref<16x32xf32, #tpu.memory_space<vmem>>, vector<2x32xf32>
    tpu.vector_store %arg14[%c14, %c0_37], %161 {strides = array<i32>} : memref<16x32xf32, #tpu.memory_space<vmem>>, vector<2x32xf32>,
    %c0_38 = arith.constant 0 : index
    %c0_39 = arith.constant 0 : index
    %c0_40 = arith.constant 0 : index
    %163 = vector.load %arg12[%c0_38, %c0_39, %c0_40] : memref<2x2x32xf32, #tpu.memory_space<vmem>>, vector<1x2x32xf32>
    %164 = vector.shape_cast %163 : vector<1x2x32xf32> to vector<2x32xf32>
    %165 = vector.shape_cast %161 : vector<2x32xf32> to vector<1x2x32xf32>
    tpu.vector_store %arg12[%c0_38, %c0_39, %c0_40], %165 {strides = array<i32>} : memref<2x2x32xf32, #tpu.memory_space<vmem>>, vector<1x2x32xf32>,
    %c0_41 = arith.constant 0 : index
    %c0_42 = arith.constant 0 : index
    %c0_43 = arith.constant 0 : index
    %166 = vector.load %arg13[%c0_41, %c0_42, %c0_43] : memref<2x2x32xf32, #tpu.memory_space<vmem>>, vector<1x2x32xf32>
    %167 = vector.shape_cast %166 : vector<1x2x32xf32> to vector<2x32xf32>
    %168 = vector.shape_cast %159 : vector<2x32xf32> to vector<1x2x32xf32>
    tpu.vector_store %arg13[%c0_41, %c0_42, %c0_43], %168 {strides = array<i32>} : memref<2x2x32xf32, #tpu.memory_space<vmem>>, vector<1x2x32xf32>,
    %c0_44 = arith.constant 0 : index
    %c0_45 = arith.constant 0 : index
    %169 = vector.load %arg14[%c0_44, %c0_45] : memref<16x32xf32, #tpu.memory_space<vmem>>, vector<16x32xf32>
    %c0_46 = arith.constant 0 : index
    %c0_47 = arith.constant 0 : index
    %170 = vector.load %arg4[%c0_46, %c0_47] : memref<32x128xf32, #tpu.memory_space<vmem>>, vector<32x128xf32>
    %cst_48 = arith.constant dense<0.000000e+00> : vector<16x128xf32>
    %171 = tpu.matmul %169, %170, %cst_48 {dimension_numbers = #tpu.dot_dimension_numbers<[1], [0], [0], [1], [0, 0, 1, 1], [], []>} : vector<16x32xf32>, vector<32x128xf32>, vector<16x128xf32> -> vector<16x128xf32>
    %c0_49 = arith.constant 0 : index
    %c0_50 = arith.constant 0 : index
    %172 = vector.load %arg6[%c0_49, %c0_50] : memref<1x128xf32, #tpu.memory_space<vmem>>, vector<1x128xf32>
    %173 = vector.broadcast %172 : vector<1x128xf32> to vector<16x128xf32>
    %174 = arith.addf %171, %173 : vector<16x128xf32>
    %c0_51 = arith.constant 0 : index
    %c0_52 = arith.constant 0 : index
    %175 = vector.load %arg5[%c0_51, %c0_52] : memref<32x128xf32, #tpu.memory_space<vmem>>, vector<32x128xf32>
    %c1 = arith.constant 1 : index
    %c0_53 = arith.constant 0 : index
    %c0_54 = arith.constant 0 : index
    %176 = vector.load %arg7[%c1, %c0_53, %c0_54] : memref<2x2x32xf32, #tpu.memory_space<vmem>>, vector<1x2x32xf32>
    %177 = vector.shape_cast %176 : vector<1x2x32xf32> to vector<2x32xf32>
    %c1_55 = arith.constant 1 : index
    %c0_56 = arith.constant 0 : index
    %c0_57 = arith.constant 0 : index
    %178 = vector.load %arg8[%c1_55, %c0_56, %c0_57] : memref<2x2x32xf32, #tpu.memory_space<vmem>>, vector<1x2x32xf32>
    %179 = vector.shape_cast %178 : vector<1x2x32xf32> to vector<2x32xf32>
    %180 = vector.extract_strided_slice %174 {offsets = [0, 0], sizes = [2, 128], strides = [1, 1]} : vector<16x128xf32> to vector<2x128xf32>
    %cst_58 = arith.constant dense<0.000000e+00> : vector<2x128xf32>
    %181 = tpu.matmul %177, %175, %cst_58 {dimension_numbers = #tpu.dot_dimension_numbers<[1], [0], [0], [1], [0, 0, 1, 1], [], []>} : vector<2x32xf32>, vector<32x128xf32>, vector<2x128xf32> -> vector<2x128xf32>
    %182 = arith.addf %180, %181 : vector<2x128xf32>
    %183 = arith.negf %182 : vector<2x128xf32>
    %184 = math.exp %183 : vector<2x128xf32>
    %cst_59 = arith.constant 1.000000e+00 : f32
    %185 = vector.broadcast %cst_59 : f32 to vector<2x128xf32>
    %186 = arith.addf %185, %184 : vector<2x128xf32>
    %187 = arith.divf %185, %186 : vector<2x128xf32>
    %188 = vector.extract_strided_slice %187 {offsets = [0, 0], sizes = [2, 32], strides = [1, 1]} : vector<2x128xf32> to vector<2x32xf32>
    %189 = vector.extract_strided_slice %187 {offsets = [0, 32], sizes = [2, 32], strides = [1, 1]} : vector<2x128xf32> to vector<2x32xf32>
    %190 = vector.extract_strided_slice %187 {offsets = [0, 96], sizes = [2, 32], strides = [1, 1]} : vector<2x128xf32> to vector<2x32xf32>
    %191 = vector.extract_strided_slice %182 {offsets = [0, 64], sizes = [2, 32], strides = [1, 1]} : vector<2x128xf32> to vector<2x32xf32>
    %192 = math.tanh %191 : vector<2x32xf32>
    %193 = arith.mulf %189, %179 : vector<2x32xf32>
    %194 = arith.mulf %188, %192 : vector<2x32xf32>
    %195 = arith.addf %193, %194 : vector<2x32xf32>
    %196 = math.tanh %195 : vector<2x32xf32>
    %197 = arith.mulf %190, %196 : vector<2x32xf32>
    %198 = vector.extract_strided_slice %174 {offsets = [2, 0], sizes = [2, 128], strides = [1, 1]} : vector<16x128xf32> to vector<2x128xf32>
    %cst_60 = arith.constant dense<0.000000e+00> : vector<2x128xf32>
    %199 = tpu.matmul %197, %175, %cst_60 {dimension_numbers = #tpu.dot_dimension_numbers<[1], [0], [0], [1], [0, 0, 1, 1], [], []>} : vector<2x32xf32>, vector<32x128xf32>, vector<2x128xf32> -> vector<2x128xf32>
    %200 = arith.addf %198, %199 : vector<2x128xf32>
    %201 = arith.negf %200 : vector<2x128xf32>
    %202 = math.exp %201 : vector<2x128xf32>
    %cst_61 = arith.constant 1.000000e+00 : f32
    %203 = vector.broadcast %cst_61 : f32 to vector<2x128xf32>
    %204 = arith.addf %203, %202 : vector<2x128xf32>
    %205 = arith.divf %203, %204 : vector<2x128xf32>
    %206 = vector.extract_strided_slice %205 {offsets = [0, 0], sizes = [2, 32], strides = [1, 1]} : vector<2x128xf32> to vector<2x32xf32>
    %207 = vector.extract_strided_slice %205 {offsets = [0, 32], sizes = [2, 32], strides = [1, 1]} : vector<2x128xf32> to vector<2x32xf32>
    %208 = vector.extract_strided_slice %205 {offsets = [0, 96], sizes = [2, 32], strides = [1, 1]} : vector<2x128xf32> to vector<2x32xf32>
    %209 = vector.extract_strided_slice %200 {offsets = [0, 64], sizes = [2, 32], strides = [1, 1]} : vector<2x128xf32> to vector<2x32xf32>
    %210 = math.tanh %209 : vector<2x32xf32>
    %211 = arith.mulf %207, %195 : vector<2x32xf32>
    %212 = arith.mulf %206, %210 : vector<2x32xf32>
    %213 = arith.addf %211, %212 : vector<2x32xf32>
    %214 = math.tanh %213 : vector<2x32xf32>
    %215 = arith.mulf %208, %214 : vector<2x32xf32>
    %216 = vector.extract_strided_slice %174 {offsets = [4, 0], sizes = [2, 128], strides = [1, 1]} : vector<16x128xf32> to vector<2x128xf32>
    %cst_62 = arith.constant dense<0.000000e+00> : vector<2x128xf32>
    %217 = tpu.matmul %215, %175, %cst_62 {dimension_numbers = #tpu.dot_dimension_numbers<[1], [0], [0], [1], [0, 0, 1, 1], [], []>} : vector<2x32xf32>, vector<32x128xf32>, vector<2x128xf32> -> vector<2x128xf32>
    %218 = arith.addf %216, %217 : vector<2x128xf32>
    %219 = arith.negf %218 : vector<2x128xf32>
    %220 = math.exp %219 : vector<2x128xf32>
    %cst_63 = arith.constant 1.000000e+00 : f32
    %221 = vector.broadcast %cst_63 : f32 to vector<2x128xf32>
    %222 = arith.addf %221, %220 : vector<2x128xf32>
    %223 = arith.divf %221, %222 : vector<2x128xf32>
    %224 = vector.extract_strided_slice %223 {offsets = [0, 0], sizes = [2, 32], strides = [1, 1]} : vector<2x128xf32> to vector<2x32xf32>
    %225 = vector.extract_strided_slice %223 {offsets = [0, 32], sizes = [2, 32], strides = [1, 1]} : vector<2x128xf32> to vector<2x32xf32>
    %226 = vector.extract_strided_slice %223 {offsets = [0, 96], sizes = [2, 32], strides = [1, 1]} : vector<2x128xf32> to vector<2x32xf32>
    %227 = vector.extract_strided_slice %218 {offsets = [0, 64], sizes = [2, 32], strides = [1, 1]} : vector<2x128xf32> to vector<2x32xf32>
    %228 = math.tanh %227 : vector<2x32xf32>
    %229 = arith.mulf %225, %213 : vector<2x32xf32>
    %230 = arith.mulf %224, %228 : vector<2x32xf32>
    %231 = arith.addf %229, %230 : vector<2x32xf32>
    %232 = math.tanh %231 : vector<2x32xf32>
    %233 = arith.mulf %226, %232 : vector<2x32xf32>
    %234 = vector.extract_strided_slice %174 {offsets = [6, 0], sizes = [2, 128], strides = [1, 1]} : vector<16x128xf32> to vector<2x128xf32>
    %cst_64 = arith.constant dense<0.000000e+00> : vector<2x128xf32>
    %235 = tpu.matmul %233, %175, %cst_64 {dimension_numbers = #tpu.dot_dimension_numbers<[1], [0], [0], [1], [0, 0, 1, 1], [], []>} : vector<2x32xf32>, vector<32x128xf32>, vector<2x128xf32> -> vector<2x128xf32>
    %236 = arith.addf %234, %235 : vector<2x128xf32>
    %237 = arith.negf %236 : vector<2x128xf32>
    %238 = math.exp %237 : vector<2x128xf32>
    %cst_65 = arith.constant 1.000000e+00 : f32
    %239 = vector.broadcast %cst_65 : f32 to vector<2x128xf32>
    %240 = arith.addf %239, %238 : vector<2x128xf32>
    %241 = arith.divf %239, %240 : vector<2x128xf32>
    %242 = vector.extract_strided_slice %241 {offsets = [0, 0], sizes = [2, 32], strides = [1, 1]} : vector<2x128xf32> to vector<2x32xf32>
    %243 = vector.extract_strided_slice %241 {offsets = [0, 32], sizes = [2, 32], strides = [1, 1]} : vector<2x128xf32> to vector<2x32xf32>
    %244 = vector.extract_strided_slice %241 {offsets = [0, 96], sizes = [2, 32], strides = [1, 1]} : vector<2x128xf32> to vector<2x32xf32>
    %245 = vector.extract_strided_slice %236 {offsets = [0, 64], sizes = [2, 32], strides = [1, 1]} : vector<2x128xf32> to vector<2x32xf32>
    %246 = math.tanh %245 : vector<2x32xf32>
    %247 = arith.mulf %243, %231 : vector<2x32xf32>
    %248 = arith.mulf %242, %246 : vector<2x32xf32>
    %249 = arith.addf %247, %248 : vector<2x32xf32>
    %250 = math.tanh %249 : vector<2x32xf32>
    %251 = arith.mulf %244, %250 : vector<2x32xf32>
    %252 = vector.extract_strided_slice %174 {offsets = [8, 0], sizes = [2, 128], strides = [1, 1]} : vector<16x128xf32> to vector<2x128xf32>
    %cst_66 = arith.constant dense<0.000000e+00> : vector<2x128xf32>
    %253 = tpu.matmul %251, %175, %cst_66 {dimension_numbers = #tpu.dot_dimension_numbers<[1], [0], [0], [1], [0, 0, 1, 1], [], []>} : vector<2x32xf32>, vector<32x128xf32>, vector<2x128xf32> -> vector<2x128xf32>
    %254 = arith.addf %252, %253 : vector<2x128xf32>
    %255 = arith.negf %254 : vector<2x128xf32>
    %256 = math.exp %255 : vector<2x128xf32>
    %cst_67 = arith.constant 1.000000e+00 : f32
    %257 = vector.broadcast %cst_67 : f32 to vector<2x128xf32>
    %258 = arith.addf %257, %256 : vector<2x128xf32>
    %259 = arith.divf %257, %258 : vector<2x128xf32>
    %260 = vector.extract_strided_slice %259 {offsets = [0, 0], sizes = [2, 32], strides = [1, 1]} : vector<2x128xf32> to vector<2x32xf32>
    %261 = vector.extract_strided_slice %259 {offsets = [0, 32], sizes = [2, 32], strides = [1, 1]} : vector<2x128xf32> to vector<2x32xf32>
    %262 = vector.extract_strided_slice %259 {offsets = [0, 96], sizes = [2, 32], strides = [1, 1]} : vector<2x128xf32> to vector<2x32xf32>
    %263 = vector.extract_strided_slice %254 {offsets = [0, 64], sizes = [2, 32], strides = [1, 1]} : vector<2x128xf32> to vector<2x32xf32>
    %264 = math.tanh %263 : vector<2x32xf32>
    %265 = arith.mulf %261, %249 : vector<2x32xf32>
    %266 = arith.mulf %260, %264 : vector<2x32xf32>
    %267 = arith.addf %265, %266 : vector<2x32xf32>
    %268 = math.tanh %267 : vector<2x32xf32>
    %269 = arith.mulf %262, %268 : vector<2x32xf32>
    %270 = vector.extract_strided_slice %174 {offsets = [10, 0], sizes = [2, 128], strides = [1, 1]} : vector<16x128xf32> to vector<2x128xf32>
    %cst_68 = arith.constant dense<0.000000e+00> : vector<2x128xf32>
    %271 = tpu.matmul %269, %175, %cst_68 {dimension_numbers = #tpu.dot_dimension_numbers<[1], [0], [0], [1], [0, 0, 1, 1], [], []>} : vector<2x32xf32>, vector<32x128xf32>, vector<2x128xf32> -> vector<2x128xf32>
    %272 = arith.addf %270, %271 : vector<2x128xf32>
    %273 = arith.negf %272 : vector<2x128xf32>
    %274 = math.exp %273 : vector<2x128xf32>
    %cst_69 = arith.constant 1.000000e+00 : f32
    %275 = vector.broadcast %cst_69 : f32 to vector<2x128xf32>
    %276 = arith.addf %275, %274 : vector<2x128xf32>
    %277 = arith.divf %275, %276 : vector<2x128xf32>
    %278 = vector.extract_strided_slice %277 {offsets = [0, 0], sizes = [2, 32], strides = [1, 1]} : vector<2x128xf32> to vector<2x32xf32>
    %279 = vector.extract_strided_slice %277 {offsets = [0, 32], sizes = [2, 32], strides = [1, 1]} : vector<2x128xf32> to vector<2x32xf32>
    %280 = vector.extract_strided_slice %277 {offsets = [0, 96], sizes = [2, 32], strides = [1, 1]} : vector<2x128xf32> to vector<2x32xf32>
    %281 = vector.extract_strided_slice %272 {offsets = [0, 64], sizes = [2, 32], strides = [1, 1]} : vector<2x128xf32> to vector<2x32xf32>
    %282 = math.tanh %281 : vector<2x32xf32>
    %283 = arith.mulf %279, %267 : vector<2x32xf32>
    %284 = arith.mulf %278, %282 : vector<2x32xf32>
    %285 = arith.addf %283, %284 : vector<2x32xf32>
    %286 = math.tanh %285 : vector<2x32xf32>
    %287 = arith.mulf %280, %286 : vector<2x32xf32>
    %288 = vector.extract_strided_slice %174 {offsets = [12, 0], sizes = [2, 128], strides = [1, 1]} : vector<16x128xf32> to vector<2x128xf32>
    %cst_70 = arith.constant dense<0.000000e+00> : vector<2x128xf32>
    %289 = tpu.matmul %287, %175, %cst_70 {dimension_numbers = #tpu.dot_dimension_numbers<[1], [0], [0], [1], [0, 0, 1, 1], [], []>} : vector<2x32xf32>, vector<32x128xf32>, vector<2x128xf32> -> vector<2x128xf32>
    %290 = arith.addf %288, %289 : vector<2x128xf32>
    %291 = arith.negf %290 : vector<2x128xf32>
    %292 = math.exp %291 : vector<2x128xf32>
    %cst_71 = arith.constant 1.000000e+00 : f32
    %293 = vector.broadcast %cst_71 : f32 to vector<2x128xf32>
    %294 = arith.addf %293, %292 : vector<2x128xf32>
    %295 = arith.divf %293, %294 : vector<2x128xf32>
    %296 = vector.extract_strided_slice %295 {offsets = [0, 0], sizes = [2, 32], strides = [1, 1]} : vector<2x128xf32> to vector<2x32xf32>
    %297 = vector.extract_strided_slice %295 {offsets = [0, 32], sizes = [2, 32], strides = [1, 1]} : vector<2x128xf32> to vector<2x32xf32>
    %298 = vector.extract_strided_slice %295 {offsets = [0, 96], sizes = [2, 32], strides = [1, 1]} : vector<2x128xf32> to vector<2x32xf32>
    %299 = vector.extract_strided_slice %290 {offsets = [0, 64], sizes = [2, 32], strides = [1, 1]} : vector<2x128xf32> to vector<2x32xf32>
    %300 = math.tanh %299 : vector<2x32xf32>
    %301 = arith.mulf %297, %285 : vector<2x32xf32>
    %302 = arith.mulf %296, %300 : vector<2x32xf32>
    %303 = arith.addf %301, %302 : vector<2x32xf32>
    %304 = math.tanh %303 : vector<2x32xf32>
    %305 = arith.mulf %298, %304 : vector<2x32xf32>
    %306 = vector.extract_strided_slice %174 {offsets = [14, 0], sizes = [2, 128], strides = [1, 1]} : vector<16x128xf32> to vector<2x128xf32>
    %cst_72 = arith.constant dense<0.000000e+00> : vector<2x128xf32>
    %307 = tpu.matmul %305, %175, %cst_72 {dimension_numbers = #tpu.dot_dimension_numbers<[1], [0], [0], [1], [0, 0, 1, 1], [], []>} : vector<2x32xf32>, vector<32x128xf32>, vector<2x128xf32> -> vector<2x128xf32>
    %308 = arith.addf %306, %307 : vector<2x128xf32>
    %309 = arith.negf %308 : vector<2x128xf32>
    %310 = math.exp %309 : vector<2x128xf32>
    %cst_73 = arith.constant 1.000000e+00 : f32
    %311 = vector.broadcast %cst_73 : f32 to vector<2x128xf32>
    %312 = arith.addf %311, %310 : vector<2x128xf32>
    %313 = arith.divf %311, %312 : vector<2x128xf32>
    %314 = vector.extract_strided_slice %313 {offsets = [0, 0], sizes = [2, 32], strides = [1, 1]} : vector<2x128xf32> to vector<2x32xf32>
    %315 = vector.extract_strided_slice %313 {offsets = [0, 32], sizes = [2, 32], strides = [1, 1]} : vector<2x128xf32> to vector<2x32xf32>
    %316 = vector.extract_strided_slice %313 {offsets = [0, 96], sizes = [2, 32], strides = [1, 1]} : vector<2x128xf32> to vector<2x32xf32>
    %317 = vector.extract_strided_slice %308 {offsets = [0, 64], sizes = [2, 32], strides = [1, 1]} : vector<2x128xf32> to vector<2x32xf32>
    %318 = math.tanh %317 : vector<2x32xf32>
    %319 = arith.mulf %315, %303 : vector<2x32xf32>
    %320 = arith.mulf %314, %318 : vector<2x32xf32>
    %321 = arith.addf %319, %320 : vector<2x32xf32>
    %322 = math.tanh %321 : vector<2x32xf32>
    %323 = arith.mulf %316, %322 : vector<2x32xf32>
    %c1_74 = arith.constant 1 : index
    %c0_75 = arith.constant 0 : index
    %c0_76 = arith.constant 0 : index
    %324 = vector.load %arg12[%c1_74, %c0_75, %c0_76] : memref<2x2x32xf32, #tpu.memory_space<vmem>>, vector<1x2x32xf32>
    %325 = vector.shape_cast %324 : vector<1x2x32xf32> to vector<2x32xf32>
    %326 = vector.shape_cast %323 : vector<2x32xf32> to vector<1x2x32xf32>
    tpu.vector_store %arg12[%c1_74, %c0_75, %c0_76], %326 {strides = array<i32>} : memref<2x2x32xf32, #tpu.memory_space<vmem>>, vector<1x2x32xf32>,
    %c1_77 = arith.constant 1 : index
    %c0_78 = arith.constant 0 : index
    %c0_79 = arith.constant 0 : index
    %327 = vector.load %arg13[%c1_77, %c0_78, %c0_79] : memref<2x2x32xf32, #tpu.memory_space<vmem>>, vector<1x2x32xf32>
    %328 = vector.shape_cast %327 : vector<1x2x32xf32> to vector<2x32xf32>
    %329 = vector.shape_cast %321 : vector<2x32xf32> to vector<1x2x32xf32>
    tpu.vector_store %arg13[%c1_77, %c0_78, %c0_79], %329 {strides = array<i32>} : memref<2x2x32xf32, #tpu.memory_space<vmem>>, vector<1x2x32xf32>,
    %c0_80 = arith.constant 0 : index
    %c0_81 = arith.constant 0 : index
    %330 = vector.load %arg9[%c0_80, %c0_81] : memref<32x1xf32, #tpu.memory_space<vmem>>, vector<32x1xf32>
    %cst_82 = arith.constant dense<0.000000e+00> : vector<2x1xf32>
    %331 = tpu.matmul %323, %330, %cst_82 {dimension_numbers = #tpu.dot_dimension_numbers<[1], [0], [0], [1], [0, 0, 1, 1], [], []>} : vector<2x32xf32>, vector<32x1xf32>, vector<2x1xf32> -> vector<2x1xf32>
    %c0_83 = arith.constant 0 : index
    %c0_84 = arith.constant 0 : index
    %332 = vector.load %arg10[%c0_83, %c0_84] : memref<1x1xf32, #tpu.memory_space<vmem>>, vector<1x1xf32>
    %333 = vector.broadcast %332 : vector<1x1xf32> to vector<2x1xf32>
    %334 = arith.addf %331, %333 : vector<2x1xf32>
    %335 = arith.negf %334 : vector<2x1xf32>
    %336 = math.exp %335 : vector<2x1xf32>
    %cst_85 = arith.constant 1.000000e+00 : f32
    %337 = vector.broadcast %cst_85 : f32 to vector<2x1xf32>
    %338 = arith.addf %337, %336 : vector<2x1xf32>
    %339 = arith.divf %337, %338 : vector<2x1xf32>
    %c0_86 = arith.constant 0 : index
    %c0_87 = arith.constant 0 : index
    %340 = vector.load %arg11[%c0_86, %c0_87] : memref<2x1xf32, #tpu.memory_space<vmem>>, vector<2x1xf32>
    tpu.vector_store %arg11[%c0_86, %c0_87], %339 {strides = array<i32>} : memref<2x1xf32, #tpu.memory_space<vmem>>, vector<2x1xf32>,
    return
  }
}

</mosaic_0001>

<llo_original>
// kernel: sentiment_lstm_forward.1
$region0: #{sentiment_lstm_forward.1}
  #allocation0 [shape = 'u32[]', space=smem, size = 0x4, offset = 0x4, fixed_abs, tag = 'smem constant byte address 0x4 - core index']
  #allocation1 [shape = 'u32[144,128]{1,0:T(1,128)}', space=vmem, size = 0x12000, scoped, tag = 'internal scratch']
  #allocation2 [shape = 'f32[16,32]{1,0:T(8,128)}', space=vmem, size = 0x2000, scoped, tag = 'scratch operand']
  #allocation3 [shape = 'f32[1,1]{1,0:T(1,128)S(1)}', space=vmem, size = 0x200, scoped, tag = 'scoped memory for sentiment_lstm_forward.1']
  %s0 = inlined_call_operand.vmem [shape: f32[16,16], index: 0, kind: input, shape index: {}]
  %s1 = inlined_call_operand.vmem [shape: f32[16,128], index: 1, kind: input, shape index: {}]
  %s2 = inlined_call_operand.vmem [shape: f32[32,128], index: 2, kind: input, shape index: {}]
  %s3 = inlined_call_operand.vmem [shape: f32[1,128], index: 3, kind: input, shape index: {}]
  %s4 = inlined_call_operand.vmem [shape: f32[32,128], index: 4, kind: input, shape index: {}]
  %s5 = inlined_call_operand.vmem [shape: f32[32,128], index: 5, kind: input, shape index: {}]
  %s6 = inlined_call_operand.vmem [shape: f32[1,128], index: 6, kind: input, shape index: {}]
  %s7 = inlined_call_operand.vmem [shape: f32[2,2,32], index: 7, kind: input, shape index: {}]
  %s8 = inlined_call_operand.vmem [shape: f32[2,2,32], index: 8, kind: input, shape index: {}]
  %s9 = inlined_call_operand.vmem [shape: f32[32,1], index: 9, kind: input, shape index: {}]
  %s10 = inlined_call_operand.<no memory space> [shape: f32[1,1], index: 10, kind: input, shape index: {}]
  %s11 = inlined_call_operand.vmem [shape: f32[2,1], index: 11, kind: output, shape index: {0}]
  %s12 = inlined_call_operand.hbm [shape: f32[2,2,32], index: 12, kind: output, shape index: {1}]
  %s13 = inlined_call_operand.hbm [shape: f32[2,2,32], index: 13, kind: output, shape index: {2}]
  %14 = xla_tuple %s11, %s12, %s13
  %s15 = sld [smem:[#allocation0]]
  $region70: #{sentiment_lstm_forward.1} parent=0
    _
  %s17 = ssub.s32 1, %s15
  %s18 = scalar_select 0, %s17, %s15
  %v19 = vstv %s10
  %20 = vst [vmem:[#allocation3] sm:$0x1] %v19
  $region1: #{sentiment_lstm_forward.1} parent=0
    #allocation4 [shape = 'u8[2048]{0}', space=vmem, size = 0x800, scoped, tag = 'output window, operand 1, single buffered']
    #allocation5 [shape = 's32[1]{0}', space=sflag, size = 0x4, scoped, tag = 'scoped memory for sentiment_lstm_forward.1']
    #allocation6 [shape = 'u8[2048]{0}', space=vmem, size = 0x800, scoped, tag = 'output window, operand 2, single buffered']
    #allocation7 [shape = 's32[1]{0}', space=sflag, size = 0x4, scoped, tag = 'scoped memory for sentiment_lstm_forward.1']
    %21 = vsyncpa [#allocation5], 0
    %22 = vsyncpa [#allocation7], 0
    // Predicated region
    $region2: #{sentiment_lstm_forward.1} parent=1 // pred_check
      _
    $region3: #{sentiment_lstm_forward.1} parent=1 // pred_check_branch
      %24 = sbr.rel (0) target = $region5
    $region4: #{sentiment_lstm_forward.1} parent=1 // pred_region
      _
    $region5: #{sentiment_lstm_forward.1} parent=1 // pred_fallthru
      _
    // Predicated region
    $region6: #{sentiment_lstm_forward.1} parent=1 // pred_check
      _
    $region7: #{sentiment_lstm_forward.1} parent=1 // pred_check_branch
      %26 = sbr.rel (0) target = $region9
    $region8: #{sentiment_lstm_forward.1} parent=1 // pred_region
      _
    $region9: #{sentiment_lstm_forward.1} parent=1 // pred_fallthru
      _
    // Predicated region
    $region10: #{sentiment_lstm_forward.1} parent=1 // pred_check
      _
    $region11: #{sentiment_lstm_forward.1} parent=1 // pred_check_branch
      %28 = sbr.rel (0) target = $region13
    $region12: #{sentiment_lstm_forward.1} parent=1 // pred_region
      _
    $region13: #{sentiment_lstm_forward.1} parent=1 // pred_fallthru
      _
    // Predicated region
    $region14: #{sentiment_lstm_forward.1} parent=1 // pred_check
      _
    $region15: #{sentiment_lstm_forward.1} parent=1 // pred_check_branch
      %30 = sbr.rel (0) target = $region17
    $region16: #{sentiment_lstm_forward.1} parent=1 // pred_region
      _
    $region17: #{sentiment_lstm_forward.1} parent=1 // pred_fallthru
      _
    // Predicated region
    $region18: #{sentiment_lstm_forward.1} parent=1 // pred_check
      _
    $region19: #{sentiment_lstm_forward.1} parent=1 // pred_check_branch
      %32 = sbr.rel (0) target = $region21
    $region20: #{sentiment_lstm_forward.1} parent=1 // pred_region
      _
    $region21: #{sentiment_lstm_forward.1} parent=1 // pred_fallthru
      _
    // Predicated region
    $region22: #{sentiment_lstm_forward.1} parent=1 // pred_check
      _
    $region23: #{sentiment_lstm_forward.1} parent=1 // pred_check_branch
      %34 = sbr.rel (0) target = $region25
    $region24: #{sentiment_lstm_forward.1} parent=1 // pred_region
      _
    $region25: #{sentiment_lstm_forward.1} parent=1 // pred_fallthru
      _
    // Predicated region
    $region26: #{sentiment_lstm_forward.1} parent=1 // pred_check
      _
    $region27: #{sentiment_lstm_forward.1} parent=1 // pred_check_branch
      %36 = sbr.rel (0) target = $region29
    $region28: #{sentiment_lstm_forward.1} parent=1 // pred_region
      _
    $region29: #{sentiment_lstm_forward.1} parent=1 // pred_fallthru
      _
    // Predicated region
    $region30: #{sentiment_lstm_forward.1} parent=1 // pred_check
      _
    $region31: #{sentiment_lstm_forward.1} parent=1 // pred_check_branch
      %38 = sbr.rel (0) target = $region33
    $region32: #{sentiment_lstm_forward.1} parent=1 // pred_region
      _
    $region33: #{sentiment_lstm_forward.1} parent=1 // pred_fallthru
      _
    // Predicated region
    $region34: #{sentiment_lstm_forward.1} parent=1 // pred_check
      _
    $region35: #{sentiment_lstm_forward.1} parent=1 // pred_check_branch
      %40 = sbr.rel (0) target = $region37
    $region36: #{sentiment_lstm_forward.1} parent=1 // pred_region
      _
    $region37: #{sentiment_lstm_forward.1} parent=1 // pred_fallthru
      _
    // Predicated region
    $region38: #{sentiment_lstm_forward.1} parent=1 // pred_check
      _
    $region39: #{sentiment_lstm_forward.1} parent=1 // pred_check_branch
      %42 = sbr.rel (0) target = $region41
    $region40: #{sentiment_lstm_forward.1} parent=1 // pred_region
      _
    $region41: #{sentiment_lstm_forward.1} parent=1 // pred_fallthru
      _
    // Predicated region
    $region42: #{sentiment_lstm_forward.1} parent=1 // pred_check
      _
    $region43: #{sentiment_lstm_forward.1} parent=1 // pred_check_branch
      %44 = sbr.rel (0) target = $region45
    $region44: #{sentiment_lstm_forward.1} parent=1 // pred_region
      _
    $region45: #{sentiment_lstm_forward.1} parent=1 // pred_fallthru
      _
    %v45 = vld [vmem:[%s0] sm:$0xff]
    %v46 = vld [vmem:[%s0 + $0x8] sm:$0xff]
    %v47 = vld [vmem:[%s1] sm:$0xff]
    %v48 = vld [vmem:[%s1 + $0x8] sm:$0xff]
    %v49 = vld [vmem:[%s3] sm:$0x1]
    %v51 = vlaneseq
    %v52 = vshrl.u32 %v51, 7
    %v53 = vsub.s32 0, %v52
    %v54 = vrot.slane %v49, %v53
    %vm56 = vcmask 130048
    %v58 = vsel %vm56, %v45, 0
    %v61 = vsel %vm56, %v46, 0
    %63 = vmatprep.subr.mxu0 0.0
    %64 = vmatpush1.msra.mxu0 %v47
    %65 = vmatprep.subr.mxu0 0.0
    %66 = vmatpush1.msra.mxu0 %v48
    %67 = vmatprep.subr.mxu0 0.0
    %68 = vmatpush1.msra.mxu0 0.0
    %69 = vmatprep.subr.mxu0 0.0
    %70 = vmatpush1.msra.mxu0 0.0
    %71 = vmatprep.subr.mxu0 0.0
    %72 = vmatpush1.msra.mxu0 0.0
    %73 = vmatprep.subr.mxu0 0.0
    %74 = vmatpush1.msra.mxu0 0.0
    %75 = vmatprep.subr.mxu0 0.0
    %76 = vmatpush1.msra.mxu0 0.0
    %77 = vmatprep.subr.mxu0 0.0
    %78 = vmatpush1.msra.mxu0 0.0
    %79 = vmatprep.subr.mxu0 0.0
    %80 = vmatpush1.msra.mxu0 0.0
    %81 = vmatprep.subr.mxu0 0.0
    %82 = vmatpush1.msra.mxu0 0.0
    %83 = vmatprep.subr.mxu0 0.0
    %84 = vmatpush1.msra.mxu0 0.0
    %85 = vmatprep.subr.mxu0 0.0
    %86 = vmatpush1.msra.mxu0 0.0
    %87 = vmatprep.subr.mxu0 0.0
    %88 = vmatpush1.msra.mxu0 0.0
    %89 = vmatprep.subr.mxu0 0.0
    %90 = vmatpush1.msra.mxu0 0.0
    %91 = vmatprep.subr.mxu0 0.0
    %92 = vmatpush1.msra.mxu0 0.0
    %93 = vmatprep.subr.mxu0 0.0
    %94 = vmatpush1.msra.mxu0 0.0
    %95 = vmatprep.subr.mxu0 0.0
    %96 = vmatpush1.msra.mxu0 0.0
    %97 = vmatprep.subr.mxu0 0.0
    %98 = vmatpush1.msra.mxu0 0.0
    %99 = vmatprep.subr.mxu0 0.0
    %100 = vmatpush1.msra.mxu0 0.0
    %101 = vmatprep.subr.mxu0 0.0
    %102 = vmatpush1.msra.mxu0 0.0
    %103 = vmatprep.subr.mxu0 0.0
    %104 = vmatpush1.msra.mxu0 0.0
    %105 = vmatprep.subr.mxu0 0.0
    %106 = vmatpush1.msra.mxu0 0.0
    %107 = vmatprep.subr.mxu0 0.0
    %108 = vmatpush1.msra.mxu0 0.0
    %109 = vmatprep.subr.mxu0 0.0
    %110 = vmatpush1.msra.mxu0 0.0
    %111 = vmatprep.subr.mxu0 0.0
    %112 = vmatpush1.msra.mxu0 0.0
    %113 = vmatprep.subr.mxu0 0.0
    %114 = vmatpush1.msra.mxu0 0.0
    %115 = vmatprep.subr.mxu0 0.0
    %116 = vmatpush1.msra.mxu0 0.0
    %117 = vmatprep.subr.mxu0 0.0
    %118 = vmatpush1.msra.mxu0 0.0
    %119 = vmatprep.subr.mxu0 0.0
    %120 = vmatpush1.msra.mxu0 0.0
    %121 = vmatprep.subr.mxu0 0.0
    %122 = vmatpush1.msra.mxu0 0.0
    %123 = vmatprep.subr.mxu0 0.0
    %124 = vmatpush1.msra.mxu0 0.0
    %125 = vmatprep.subr.mxu0 0.0
    %126 = vmatpush1.msra.mxu0 0.0
    %127 = vmatprep.mubr.f32.mxu0 0.0
    %128 = vmatmul.mubr.f32.gmra.mrb[0].mxu0 %v58
    %v129 = vpop.f32.mrb[0].mxu0
    %v130 = vadd.f32 %v54, %v129
    %v131 = vpop.f32.mrb[0].mxu0
    %132 = vmatprep.mubr.f32.mxu0 0.0
    %133 = vmatmul.mubr.f32.gmra.mrb[0].mxu0 %v61
    %v134 = vpop.f32.mrb[0].mxu0
    %v135 = vadd.f32 %v54, %v134
    %v136 = vpop.f32.mrb[0].mxu0
    %137 = vdwg.mxu0
    %v138 = vld [vmem:[%s2] sm:$0xff]
    %v139 = vld [vmem:[%s2 + $0x8] sm:$0xff]
    %v140 = vld [vmem:[%s2 + $0x10] sm:$0xff]
    %v141 = vld [vmem:[%s2 + $0x18] sm:$0xff]
    %v142 = vld [vmem:[%s7] sm:$0x3]
    %v143 = vld [vmem:[%s8] sm:$0x3]
    %vm144 = vcmask 261120
    %v146 = vsel %vm144, %v142, 0
    %148 = vmatprep.subr.mxu0 0.0
    %149 = vmatpush1.msra.mxu0 %v138
    %150 = vmatprep.subr.mxu0 0.0
    %151 = vmatpush1.msra.mxu0 %v139
    %152 = vmatprep.subr.mxu0 0.0
    %153 = vmatpush1.msra.mxu0 %v140
    %154 = vmatprep.subr.mxu0 0.0
    %155 = vmatpush1.msra.mxu0 %v141
    %156 = vmatprep.subr.mxu0 0.0
    %157 = vmatpush1.msra.mxu0 0.0
    %158 = vmatprep.subr.mxu0 0.0
    %159 = vmatpush1.msra.mxu0 0.0
    %160 = vmatprep.subr.mxu0 0.0
    %161 = vmatpush1.msra.mxu0 0.0
    %162 = vmatprep.subr.mxu0 0.0
    %163 = vmatpush1.msra.mxu0 0.0
    %164 = vmatprep.subr.mxu0 0.0
    %165 = vmatpush1.msra.mxu0 0.0
    %166 = vmatprep.subr.mxu0 0.0
    %167 = vmatpush1.msra.mxu0 0.0
    %168 = vmatprep.subr.mxu0 0.0
    %169 = vmatpush1.msra.mxu0 0.0
    %170 = vmatprep.subr.mxu0 0.0
    %171 = vmatpush1.msra.mxu0 0.0
    %172 = vmatprep.subr.mxu0 0.0
    %173 = vmatpush1.msra.mxu0 0.0
    %174 = vmatprep.subr.mxu0 0.0
    %175 = vmatpush1.msra.mxu0 0.0
    %176 = vmatprep.subr.mxu0 0.0
    %177 = vmatpush1.msra.mxu0 0.0
    %178 = vmatprep.subr.mxu0 0.0
    %179 = vmatpush1.msra.mxu0 0.0
    %180 = vmatprep.subr.mxu0 0.0
    %181 = vmatpush1.msra.mxu0 0.0
    %182 = vmatprep.subr.mxu0 0.0
    %183 = vmatpush1.msra.mxu0 0.0
    %184 = vmatprep.subr.mxu0 0.0
    %185 = vmatpush1.msra.mxu0 0.0
    %186 = vmatprep.subr.mxu0 0.0
    %187 = vmatpush1.msra.mxu0 0.0
    %188 = vmatprep.subr.mxu0 0.0
    %189 = vmatpush1.msra.mxu0 0.0
    %190 = vmatprep.subr.mxu0 0.0
    %191 = vmatpush1.msra.mxu0 0.0
    %192 = vmatprep.subr.mxu0 0.0
    %193 = vmatpush1.msra.mxu0 0.0
    %194 = vmatprep.subr.mxu0 0.0
    %195 = vmatpush1.msra.mxu0 0.0
    %196 = vmatprep.subr.mxu0 0.0
    %197 = vmatpush1.msra.mxu0 0.0
    %198 = vmatprep.subr.mxu0 0.0
    %199 = vmatpush1.msra.mxu0 0.0
    %200 = vmatprep.subr.mxu0 0.0
    %201 = vmatpush1.msra.mxu0 0.0
    %202 = vmatprep.subr.mxu0 0.0
    %203 = vmatpush1.msra.mxu0 0.0
    %204 = vmatprep.subr.mxu0 0.0
    %205 = vmatpush1.msra.mxu0 0.0
    %206 = vmatprep.subr.mxu0 0.0
    %207 = vmatpush1.msra.mxu0 0.0
    %208 = vmatprep.subr.mxu0 0.0
    %209 = vmatpush1.msra.mxu0 0.0
    %210 = vmatprep.subr.mxu0 0.0
    %211 = vmatpush1.msra.mxu0 0.0
    %212 = vmatprep.mubr.f32.mxu0 0.0
    %213 = vmatmul.mubr.f32.gmra.mrb[0].mxu0 %v146
    %v214 = vpop.f32.mrb[0].mxu0
    %v215 = vadd.f32 0.0, %v214
    %v216 = vpop.f32.mrb[0].mxu0
    %217 = vdwg.mxu0
    %v218 = vadd.f32 %v130, %v215
    %v219 = vxor.u32 %v218, 2147483648
    %v220 = vmul.f32 %v219, 1.442695
    %v221 = vpow.pop %v220
    %v222 = vadd.f32 %v221, 1.0
    %v223 = vrcp.pop %v222
    %v224 = vmul.f32 1.0, %v223
    %v225 = vtanh.pop %v218
    %227 = vrot.lane.b32.xlu0 %v143, 32
    %v228 = vpop.permute.xlu0 %227
    %v230 = vmul.f32 %v224, %v228
    %232 = vrot.lane.b32.xlu0 %v225, 64
    %v233 = vpop.permute.xlu0 %232
    %v235 = vmul.f32 %v224, %v233
    %237 = vrot.lane.b32.xlu0 %v235, 32
    %v238 = vpop.permute.xlu0 %237
    %v240 = vadd.f32 %v230, %v238
    %v241 = vtanh.pop %v240
    %243 = vrot.lane.b32.xlu0 %v241, 64
    %v244 = vpop.permute.xlu0 %243
    %v246 = vmul.f32 %v224, %v244
    %248 = vrot.lane.b32.xlu0 %v246, 32
    %v249 = vpop.permute.xlu0 %248
    %vm251 = vcmask 254976
    %252 = vst.msk [vmem:[#allocation2] sm:$0x3] %vm251, %v249
    %v253 = vsel %vm144, %v249, 0
    %255 = vmatprep.subr.mxu0 0.0
    %256 = vmatpush1.msra.mxu0 %v138
    %257 = vmatprep.subr.mxu0 0.0
    %258 = vmatpush1.msra.mxu0 %v139
    %259 = vmatprep.subr.mxu0 0.0
    %260 = vmatpush1.msra.mxu0 %v140
    %261 = vmatprep.subr.mxu0 0.0
    %262 = vmatpush1.msra.mxu0 %v141
    %263 = vmatprep.subr.mxu0 0.0
    %264 = vmatpush1.msra.mxu0 0.0
    %265 = vmatprep.subr.mxu0 0.0
    %266 = vmatpush1.msra.mxu0 0.0
    %267 = vmatprep.subr.mxu0 0.0
    %268 = vmatpush1.msra.mxu0 0.0
    %269 = vmatprep.subr.mxu0 0.0
    %270 = vmatpush1.msra.mxu0 0.0
    %271 = vmatprep.subr.mxu0 0.0
    %272 = vmatpush1.msra.mxu0 0.0
    %273 = vmatprep.subr.mxu0 0.0
    %274 = vmatpush1.msra.mxu0 0.0
    %275 = vmatprep.subr.mxu0 0.0
    %276 = vmatpush1.msra.mxu0 0.0
    %277 = vmatprep.subr.mxu0 0.0
    %278 = vmatpush1.msra.mxu0 0.0
    %279 = vmatprep.subr.mxu0 0.0
    %280 = vmatpush1.msra.mxu0 0.0
    %281 = vmatprep.subr.mxu0 0.0
    %282 = vmatpush1.msra.mxu0 0.0
    %283 = vmatprep.subr.mxu0 0.0
    %284 = vmatpush1.msra.mxu0 0.0
    %285 = vmatprep.subr.mxu0 0.0
    %286 = vmatpush1.msra.mxu0 0.0
    %287 = vmatprep.subr.mxu0 0.0
    %288 = vmatpush1.msra.mxu0 0.0
    %289 = vmatprep.subr.mxu0 0.0
    %290 = vmatpush1.msra.mxu0 0.0
    %291 = vmatprep.subr.mxu0 0.0
    %292 = vmatpush1.msra.mxu0 0.0
    %293 = vmatprep.subr.mxu0 0.0
    %294 = vmatpush1.msra.mxu0 0.0
    %295 = vmatprep.subr.mxu0 0.0
    %296 = vmatpush1.msra.mxu0 0.0
    %297 = vmatprep.subr.mxu0 0.0
    %298 = vmatpush1.msra.mxu0 0.0
    %299 = vmatprep.subr.mxu0 0.0
    %300 = vmatpush1.msra.mxu0 0.0
    %301 = vmatprep.subr.mxu0 0.0
    %302 = vmatpush1.msra.mxu0 0.0
    %303 = vmatprep.subr.mxu0 0.0
    %304 = vmatpush1.msra.mxu0 0.0
    %305 = vmatprep.subr.mxu0 0.0
    %306 = vmatpush1.msra.mxu0 0.0
    %307 = vmatprep.subr.mxu0 0.0
    %308 = vmatpush1.msra.mxu0 0.0
    %309 = vmatprep.subr.mxu0 0.0
    %310 = vmatpush1.msra.mxu0 0.0
    %311 = vmatprep.subr.mxu0 0.0
    %312 = vmatpush1.msra.mxu0 0.0
    %313 = vmatprep.subr.mxu0 0.0
    %314 = vmatpush1.msra.mxu0 0.0
    %315 = vmatprep.subr.mxu0 0.0
    %316 = vmatpush1.msra.mxu0 0.0
    %317 = vmatprep.subr.mxu0 0.0
    %318 = vmatpush1.msra.mxu0 0.0
    %319 = vmatprep.mubr.f32.mxu0 0.0
    %320 = vmatmul.mubr.f32.gmra.mrb[0].mxu0 %v253
    %v321 = vpop.f32.mrb[0].mxu0
    %v322 = vadd.f32 0.0, %v321
    %v323 = vpop.f32.mrb[0].mxu0
    %324 = vdwg.mxu0
    %v326 = vrot.slane %v322, 6
    %v328 = vadd.f32 %v130, %v326
    %v329 = vxor.u32 %v328, 2147483648
    %v330 = vmul.f32 %v329, 1.442695
    %v331 = vpow.pop %v330
    %v332 = vadd.f32 %v331, 1.0
    %v333 = vrcp.pop %v332
    %v334 = vmul.f32 1.0, %v333
    %v335 = vtanh.pop %v328
    %v337 = vrot.slane %v240, 6
    %v339 = vmul.f32 %v334, %v337
    %341 = vrot.lane.b32.xlu0 %v335, 64
    %v342 = vpop.permute.xlu0 %341
    %v344 = vmul.f32 %v334, %v342
    %346 = vrot.lane.b32.xlu0 %v344, 32
    %v347 = vpop.permute.xlu0 %346
    %v349 = vadd.f32 %v339, %v347
    %v350 = vtanh.pop %v349
    %352 = vrot.lane.b32.xlu0 %v350, 64
    %v353 = vpop.permute.xlu0 %352
    %v355 = vmul.f32 %v334, %v353
    %357 = vrot.lane.b32.xlu0 %v355, 32
    %v358 = vpop.permute.xlu0 %357
    %vm360 = vcmask 257026
    %361 = vst.msk [vmem:[#allocation2] sm:$0xc] %vm360, %v358
    %v362 = vrot.slane %v355, 2
    %363 = vrot.lane.b32.xlu0 %v362, 32
    %v364 = vpop.permute.xlu0 %363
    %v365 = vsel %vm144, %v364, 0
    %367 = vmatprep.subr.mxu0 0.0
    %368 = vmatpush1.msra.mxu0 %v138
    %369 = vmatprep.subr.mxu0 0.0
    %370 = vmatpush1.msra.mxu0 %v139
    %371 = vmatprep.subr.mxu0 0.0
    %372 = vmatpush1.msra.mxu0 %v140
    %373 = vmatprep.subr.mxu0 0.0
    %374 = vmatpush1.msra.mxu0 %v141
    %375 = vmatprep.subr.mxu0 0.0
    %376 = vmatpush1.msra.mxu0 0.0
    %377 = vmatprep.subr.mxu0 0.0
    %378 = vmatpush1.msra.mxu0 0.0
    %379 = vmatprep.subr.mxu0 0.0
    %380 = vmatpush1.msra.mxu0 0.0
    %381 = vmatprep.subr.mxu0 0.0
    %382 = vmatpush1.msra.mxu0 0.0
    %383 = vmatprep.subr.mxu0 0.0
    %384 = vmatpush1.msra.mxu0 0.0
    %385 = vmatprep.subr.mxu0 0.0
    %386 = vmatpush1.msra.mxu0 0.0
    %387 = vmatprep.subr.mxu0 0.0
    %388 = vmatpush1.msra.mxu0 0.0
    %389 = vmatprep.subr.mxu0 0.0
    %390 = vmatpush1.msra.mxu0 0.0
    %391 = vmatprep.subr.mxu0 0.0
    %392 = vmatpush1.msra.mxu0 0.0
    %393 = vmatprep.subr.mxu0 0.0
    %394 = vmatpush1.msra.mxu0 0.0
    %395 = vmatprep.subr.mxu0 0.0
    %396 = vmatpush1.msra.mxu0 0.0
    %397 = vmatprep.subr.mxu0 0.0
    %398 = vmatpush1.msra.mxu0 0.0
    %399 = vmatprep.subr.mxu0 0.0
    %400 = vmatpush1.msra.mxu0 0.0
    %401 = vmatprep.subr.mxu0 0.0
    %402 = vmatpush1.msra.mxu0 0.0
    %403 = vmatprep.subr.mxu0 0.0
    %404 = vmatpush1.msra.mxu0 0.0
    %405 = vmatprep.subr.mxu0 0.0
    %406 = vmatpush1.msra.mxu0 0.0
    %407 = vmatprep.subr.mxu0 0.0
    %408 = vmatpush1.msra.mxu0 0.0
    %409 = vmatprep.subr.mxu0 0.0
    %410 = vmatpush1.msra.mxu0 0.0
    %411 = vmatprep.subr.mxu0 0.0
    %412 = vmatpush1.msra.mxu0 0.0
    %413 = vmatprep.subr.mxu0 0.0
    %414 = vmatpush1.msra.mxu0 0.0
    %415 = vmatprep.subr.mxu0 0.0
    %416 = vmatpush1.msra.mxu0 0.0
    %417 = vmatprep.subr.mxu0 0.0
    %418 = vmatpush1.msra.mxu0 0.0
    %419 = vmatprep.subr.mxu0 0.0
    %420 = vmatpush1.msra.mxu0 0.0
    %421 = vmatprep.subr.mxu0 0.0
    %422 = vmatpush1.msra.mxu0 0.0
    %423 = vmatprep.subr.mxu0 0.0
    %424 = vmatpush1.msra.mxu0 0.0
    %425 = vmatprep.subr.mxu0 0.0
    %426 = vmatpush1.msra.mxu0 0.0
    %427 = vmatprep.subr.mxu0 0.0
    %428 = vmatpush1.msra.mxu0 0.0
    %429 = vmatprep.subr.mxu0 0.0
    %430 = vmatpush1.msra.mxu0 0.0
    %431 = vmatprep.mubr.f32.mxu0 0.0
    %432 = vmatmul.mubr.f32.gmra.mrb[0].mxu0 %v365
    %v433 = vpop.f32.mrb[0].mxu0
    %v434 = vadd.f32 0.0, %v433
    %v435 = vpop.f32.mrb[0].mxu0
    %436 = vdwg.mxu0
    %v438 = vrot.slane %v434, 4
    %v440 = vadd.f32 %v130, %v438
    %v441 = vxor.u32 %v440, 2147483648
    %v442 = vmul.f32 %v441, 1.442695
    %v443 = vpow.pop %v442
    %v444 = vadd.f32 %v443, 1.0
    %v445 = vrcp.pop %v444
    %v446 = vmul.f32 1.0, %v445
    %v447 = vtanh.pop %v440
    %v449 = vrot.slane %v349, 6
    %v451 = vmul.f32 %v446, %v449
    %453 = vrot.lane.b32.xlu0 %v447, 64
    %v454 = vpop.permute.xlu0 %453
    %v456 = vmul.f32 %v446, %v454
    %458 = vrot.lane.b32.xlu0 %v456, 32
    %v459 = vpop.permute.xlu0 %458
    %v461 = vadd.f32 %v451, %v459
    %v462 = vtanh.pop %v461
    %464 = vrot.lane.b32.xlu0 %v462, 64
    %v465 = vpop.permute.xlu0 %464
    %v467 = vmul.f32 %v446, %v465
    %469 = vrot.lane.b32.xlu0 %v467, 32
    %v470 = vpop.permute.xlu0 %469
    %vm472 = vcmask 259076
    %473 = vst.msk [vmem:[#allocation2] sm:$0x30] %vm472, %v470
    %v474 = vrot.slane %v467, 4
    %475 = vrot.lane.b32.xlu0 %v474, 32
    %v476 = vpop.permute.xlu0 %475
    %v477 = vsel %vm144, %v476, 0
    %479 = vmatprep.subr.mxu0 0.0
    %480 = vmatpush1.msra.mxu0 %v138
    %481 = vmatprep.subr.mxu0 0.0
    %482 = vmatpush1.msra.mxu0 %v139
    %483 = vmatprep.subr.mxu0 0.0
    %484 = vmatpush1.msra.mxu0 %v140
    %485 = vmatprep.subr.mxu0 0.0
    %486 = vmatpush1.msra.mxu0 %v141
    %487 = vmatprep.subr.mxu0 0.0
    %488 = vmatpush1.msra.mxu0 0.0
    %489 = vmatprep.subr.mxu0 0.0
    %490 = vmatpush1.msra.mxu0 0.0
    %491 = vmatprep.subr.mxu0 0.0
    %492 = vmatpush1.msra.mxu0 0.0
    %493 = vmatprep.subr.mxu0 0.0
    %494 = vmatpush1.msra.mxu0 0.0
    %495 = vmatprep.subr.mxu0 0.0
    %496 = vmatpush1.msra.mxu0 0.0
    %497 = vmatprep.subr.mxu0 0.0
    %498 = vmatpush1.msra.mxu0 0.0
    %499 = vmatprep.subr.mxu0 0.0
    %500 = vmatpush1.msra.mxu0 0.0
    %501 = vmatprep.subr.mxu0 0.0
    %502 = vmatpush1.msra.mxu0 0.0
    %503 = vmatprep.subr.mxu0 0.0
    %504 = vmatpush1.msra.mxu0 0.0
    %505 = vmatprep.subr.mxu0 0.0
    %506 = vmatpush1.msra.mxu0 0.0
    %507 = vmatprep.subr.mxu0 0.0
    %508 = vmatpush1.msra.mxu0 0.0
    %509 = vmatprep.subr.mxu0 0.0
    %510 = vmatpush1.msra.mxu0 0.0
    %511 = vmatprep.subr.mxu0 0.0
    %512 = vmatpush1.msra.mxu0 0.0
    %513 = vmatprep.subr.mxu0 0.0
    %514 = vmatpush1.msra.mxu0 0.0
    %515 = vmatprep.subr.mxu0 0.0
    %516 = vmatpush1.msra.mxu0 0.0
    %517 = vmatprep.subr.mxu0 0.0
    %518 = vmatpush1.msra.mxu0 0.0
    %519 = vmatprep.subr.mxu0 0.0
    %520 = vmatpush1.msra.mxu0 0.0
    %521 = vmatprep.subr.mxu0 0.0
    %522 = vmatpush1.msra.mxu0 0.0
    %523 = vmatprep.subr.mxu0 0.0
    %524 = vmatpush1.msra.mxu0 0.0
    %525 = vmatprep.subr.mxu0 0.0
    %526 = vmatpush1.msra.mxu0 0.0
    %527 = vmatprep.subr.mxu0 0.0
    %528 = vmatpush1.msra.mxu0 0.0
    %529 = vmatprep.subr.mxu0 0.0
    %530 = vmatpush1.msra.mxu0 0.0
    %531 = vmatprep.subr.mxu0 0.0
    %532 = vmatpush1.msra.mxu0 0.0
    %533 = vmatprep.subr.mxu0 0.0
    %534 = vmatpush1.msra.mxu0 0.0
    %535 = vmatprep.subr.mxu0 0.0
    %536 = vmatpush1.msra.mxu0 0.0
    %537 = vmatprep.subr.mxu0 0.0
    %538 = vmatpush1.msra.mxu0 0.0
    %539 = vmatprep.subr.mxu0 0.0
    %540 = vmatpush1.msra.mxu0 0.0
    %541 = vmatprep.subr.mxu0 0.0
    %542 = vmatpush1.msra.mxu0 0.0
    %543 = vmatprep.mubr.f32.mxu0 0.0
    %544 = vmatmul.mubr.f32.gmra.mrb[0].mxu0 %v477
    %v545 = vpop.f32.mrb[0].mxu0
    %v546 = vadd.f32 0.0, %v545
    %v547 = vpop.f32.mrb[0].mxu0
    %548 = vdwg.mxu0
    %v550 = vrot.slane %v546, 2
    %v552 = vadd.f32 %v130, %v550
    %v553 = vxor.u32 %v552, 2147483648
    %v554 = vmul.f32 %v553, 1.442695
    %v555 = vpow.pop %v554
    %v556 = vadd.f32 %v555, 1.0
    %v557 = vrcp.pop %v556
    %v558 = vmul.f32 1.0, %v557
    %v559 = vtanh.pop %v552
    %v561 = vrot.slane %v461, 6
    %v563 = vmul.f32 %v558, %v561
    %565 = vrot.lane.b32.xlu0 %v559, 64
    %v566 = vpop.permute.xlu0 %565
    %v568 = vmul.f32 %v558, %v566
    %570 = vrot.lane.b32.xlu0 %v568, 32
    %v571 = vpop.permute.xlu0 %570
    %v573 = vadd.f32 %v563, %v571
    %v574 = vtanh.pop %v573
    %576 = vrot.lane.b32.xlu0 %v574, 64
    %v577 = vpop.permute.xlu0 %576
    %v579 = vmul.f32 %v558, %v577
    %581 = vrot.lane.b32.xlu0 %v579, 32
    %v582 = vpop.permute.xlu0 %581
    %vm584 = vcmask 261126
    %585 = vst.msk [vmem:[#allocation2] sm:$0xc0] %vm584, %v582
    %v586 = vrot.slane %v579, 6
    %587 = vrot.lane.b32.xlu0 %v586, 32
    %v588 = vpop.permute.xlu0 %587
    %v589 = vsel %vm144, %v588, 0
    %591 = vmatprep.subr.mxu0 0.0
    %592 = vmatpush1.msra.mxu0 %v138
    %593 = vmatprep.subr.mxu0 0.0
    %594 = vmatpush1.msra.mxu0 %v139
    %595 = vmatprep.subr.mxu0 0.0
    %596 = vmatpush1.msra.mxu0 %v140
    %597 = vmatprep.subr.mxu0 0.0
    %598 = vmatpush1.msra.mxu0 %v141
    %599 = vmatprep.subr.mxu0 0.0
    %600 = vmatpush1.msra.mxu0 0.0
    %601 = vmatprep.subr.mxu0 0.0
    %602 = vmatpush1.msra.mxu0 0.0
    %603 = vmatprep.subr.mxu0 0.0
    %604 = vmatpush1.msra.mxu0 0.0
    %605 = vmatprep.subr.mxu0 0.0
    %606 = vmatpush1.msra.mxu0 0.0
    %607 = vmatprep.subr.mxu0 0.0
    %608 = vmatpush1.msra.mxu0 0.0
    %609 = vmatprep.subr.mxu0 0.0
    %610 = vmatpush1.msra.mxu0 0.0
    %611 = vmatprep.subr.mxu0 0.0
    %612 = vmatpush1.msra.mxu0 0.0
    %613 = vmatprep.subr.mxu0 0.0
    %614 = vmatpush1.msra.mxu0 0.0
    %615 = vmatprep.subr.mxu0 0.0
    %616 = vmatpush1.msra.mxu0 0.0
    %617 = vmatprep.subr.mxu0 0.0
    %618 = vmatpush1.msra.mxu0 0.0
    %619 = vmatprep.subr.mxu0 0.0
    %620 = vmatpush1.msra.mxu0 0.0
    %621 = vmatprep.subr.mxu0 0.0
    %622 = vmatpush1.msra.mxu0 0.0
    %623 = vmatprep.subr.mxu0 0.0
    %624 = vmatpush1.msra.mxu0 0.0
    %625 = vmatprep.subr.mxu0 0.0
    %626 = vmatpush1.msra.mxu0 0.0
    %627 = vmatprep.subr.mxu0 0.0
    %628 = vmatpush1.msra.mxu0 0.0
    %629 = vmatprep.subr.mxu0 0.0
    %630 = vmatpush1.msra.mxu0 0.0
    %631 = vmatprep.subr.mxu0 0.0
    %632 = vmatpush1.msra.mxu0 0.0
    %633 = vmatprep.subr.mxu0 0.0
    %634 = vmatpush1.msra.mxu0 0.0
    %635 = vmatprep.subr.mxu0 0.0
    %636 = vmatpush1.msra.mxu0 0.0
    %637 = vmatprep.subr.mxu0 0.0
    %638 = vmatpush1.msra.mxu0 0.0
    %639 = vmatprep.subr.mxu0 0.0
    %640 = vmatpush1.msra.mxu0 0.0
    %641 = vmatprep.subr.mxu0 0.0
    %642 = vmatpush1.msra.mxu0 0.0
    %643 = vmatprep.subr.mxu0 0.0
    %644 = vmatpush1.msra.mxu0 0.0
    %645 = vmatprep.subr.mxu0 0.0
    %646 = vmatpush1.msra.mxu0 0.0
    %647 = vmatprep.subr.mxu0 0.0
    %648 = vmatpush1.msra.mxu0 0.0
    %649 = vmatprep.subr.mxu0 0.0
    %650 = vmatpush1.msra.mxu0 0.0
    %651 = vmatprep.subr.mxu0 0.0
    %652 = vmatpush1.msra.mxu0 0.0
    %653 = vmatprep.subr.mxu0 0.0
    %654 = vmatpush1.msra.mxu0 0.0
    %655 = vmatprep.mubr.f32.mxu0 0.0
    %656 = vmatmul.mubr.f32.gmra.mrb[0].mxu0 %v589
    %v657 = vpop.f32.mrb[0].mxu0
    %v658 = vadd.f32 0.0, %v657
    %v659 = vpop.f32.mrb[0].mxu0
    %660 = vdwg.mxu0
    %v661 = vadd.f32 %v135, %v658
    %v662 = vxor.u32 %v661, 2147483648
    %v663 = vmul.f32 %v662, 1.442695
    %v664 = vpow.pop %v663
    %v665 = vadd.f32 %v664, 1.0
    %v666 = vrcp.pop %v665
    %v667 = vmul.f32 1.0, %v666
    %v668 = vtanh.pop %v661
    %v670 = vrot.slane %v573, 6
    %v672 = vmul.f32 %v667, %v670
    %674 = vrot.lane.b32.xlu0 %v668, 64
    %v675 = vpop.permute.xlu0 %674
    %v677 = vmul.f32 %v667, %v675
    %679 = vrot.lane.b32.xlu0 %v677, 32
    %v680 = vpop.permute.xlu0 %679
    %v682 = vadd.f32 %v672, %v680
    %v683 = vtanh.pop %v682
    %685 = vrot.lane.b32.xlu0 %v683, 64
    %v686 = vpop.permute.xlu0 %685
    %v688 = vmul.f32 %v667, %v686
    %690 = vrot.lane.b32.xlu0 %v688, 32
    %v691 = vpop.permute.xlu0 %690
    %693 = vst.msk [vmem:[#allocation2 + $0x8] sm:$0x3] %vm251, %v691
    %v694 = vsel %vm144, %v691, 0
    %696 = vmatprep.subr.mxu0 0.0
    %697 = vmatpush1.msra.mxu0 %v138
    %698 = vmatprep.subr.mxu0 0.0
    %699 = vmatpush1.msra.mxu0 %v139
    %700 = vmatprep.subr.mxu0 0.0
    %701 = vmatpush1.msra.mxu0 %v140
    %702 = vmatprep.subr.mxu0 0.0
    %703 = vmatpush1.msra.mxu0 %v141
    %704 = vmatprep.subr.mxu0 0.0
    %705 = vmatpush1.msra.mxu0 0.0
    %706 = vmatprep.subr.mxu0 0.0
    %707 = vmatpush1.msra.mxu0 0.0
    %708 = vmatprep.subr.mxu0 0.0
    %709 = vmatpush1.msra.mxu0 0.0
    %710 = vmatprep.subr.mxu0 0.0
    %711 = vmatpush1.msra.mxu0 0.0
    %712 = vmatprep.subr.mxu0 0.0
    %713 = vmatpush1.msra.mxu0 0.0
    %714 = vmatprep.subr.mxu0 0.0
    %715 = vmatpush1.msra.mxu0 0.0
    %716 = vmatprep.subr.mxu0 0.0
    %717 = vmatpush1.msra.mxu0 0.0
    %718 = vmatprep.subr.mxu0 0.0
    %719 = vmatpush1.msra.mxu0 0.0
    %720 = vmatprep.subr.mxu0 0.0
    %721 = vmatpush1.msra.mxu0 0.0
    %722 = vmatprep.subr.mxu0 0.0
    %723 = vmatpush1.msra.mxu0 0.0
    %724 = vmatprep.subr.mxu0 0.0
    %725 = vmatpush1.msra.mxu0 0.0
    %726 = vmatprep.subr.mxu0 0.0
    %727 = vmatpush1.msra.mxu0 0.0
    %728 = vmatprep.subr.mxu0 0.0
    %729 = vmatpush1.msra.mxu0 0.0
    %730 = vmatprep.subr.mxu0 0.0
    %731 = vmatpush1.msra.mxu0 0.0
    %732 = vmatprep.subr.mxu0 0.0
    %733 = vmatpush1.msra.mxu0 0.0
    %734 = vmatprep.subr.mxu0 0.0
    %735 = vmatpush1.msra.mxu0 0.0
    %736 = vmatprep.subr.mxu0 0.0
    %737 = vmatpush1.msra.mxu0 0.0
    %738 = vmatprep.subr.mxu0 0.0
    %739 = vmatpush1.msra.mxu0 0.0
    %740 = vmatprep.subr.mxu0 0.0
    %741 = vmatpush1.msra.mxu0 0.0
    %742 = vmatprep.subr.mxu0 0.0
    %743 = vmatpush1.msra.mxu0 0.0
    %744 = vmatprep.subr.mxu0 0.0
    %745 = vmatpush1.msra.mxu0 0.0
    %746 = vmatprep.subr.mxu0 0.0
    %747 = vmatpush1.msra.mxu0 0.0
    %748 = vmatprep.subr.mxu0 0.0
    %749 = vmatpush1.msra.mxu0 0.0
    %750 = vmatprep.subr.mxu0 0.0
    %751 = vmatpush1.msra.mxu0 0.0
    %752 = vmatprep.subr.mxu0 0.0
    %753 = vmatpush1.msra.mxu0 0.0
    %754 = vmatprep.subr.mxu0 0.0
    %755 = vmatpush1.msra.mxu0 0.0
    %756 = vmatprep.subr.mxu0 0.0
    %757 = vmatpush1.msra.mxu0 0.0
    %758 = vmatprep.subr.mxu0 0.0
    %759 = vmatpush1.msra.mxu0 0.0
    %760 = vmatprep.mubr.f32.mxu0 0.0
    %761 = vmatmul.mubr.f32.gmra.mrb[0].mxu0 %v694
    %v762 = vpop.f32.mrb[0].mxu0
    %v763 = vadd.f32 0.0, %v762
    %v764 = vpop.f32.mrb[0].mxu0
    %765 = vdwg.mxu0
    %v767 = vrot.slane %v763, 6
    %v769 = vadd.f32 %v135, %v767
    %v770 = vxor.u32 %v769, 2147483648
    %v771 = vmul.f32 %v770, 1.442695
    %v772 = vpow.pop %v771
    %v773 = vadd.f32 %v772, 1.0
    %v774 = vrcp.pop %v773
    %v775 = vmul.f32 1.0, %v774
    %v776 = vtanh.pop %v769
    %v778 = vrot.slane %v682, 6
    %v780 = vmul.f32 %v775, %v778
    %782 = vrot.lane.b32.xlu0 %v776, 64
    %v783 = vpop.permute.xlu0 %782
    %v785 = vmul.f32 %v775, %v783
    %787 = vrot.lane.b32.xlu0 %v785, 32
    %v788 = vpop.permute.xlu0 %787
    %v790 = vadd.f32 %v780, %v788
    %v791 = vtanh.pop %v790
    %793 = vrot.lane.b32.xlu0 %v791, 64
    %v794 = vpop.permute.xlu0 %793
    %v796 = vmul.f32 %v775, %v794
    %798 = vrot.lane.b32.xlu0 %v796, 32
    %v799 = vpop.permute.xlu0 %798
    %801 = vst.msk [vmem:[#allocation2 + $0x8] sm:$0xc] %vm360, %v799
    %v802 = vrot.slane %v796, 2
    %803 = vrot.lane.b32.xlu0 %v802, 32
    %v804 = vpop.permute.xlu0 %803
    %v805 = vsel %vm144, %v804, 0
    %807 = vmatprep.subr.mxu0 0.0
    %808 = vmatpush1.msra.mxu0 %v138
    %809 = vmatprep.subr.mxu0 0.0
    %810 = vmatpush1.msra.mxu0 %v139
    %811 = vmatprep.subr.mxu0 0.0
    %812 = vmatpush1.msra.mxu0 %v140
    %813 = vmatprep.subr.mxu0 0.0
    %814 = vmatpush1.msra.mxu0 %v141
    %815 = vmatprep.subr.mxu0 0.0
    %816 = vmatpush1.msra.mxu0 0.0
    %817 = vmatprep.subr.mxu0 0.0
    %818 = vmatpush1.msra.mxu0 0.0
    %819 = vmatprep.subr.mxu0 0.0
    %820 = vmatpush1.msra.mxu0 0.0
    %821 = vmatprep.subr.mxu0 0.0
    %822 = vmatpush1.msra.mxu0 0.0
    %823 = vmatprep.subr.mxu0 0.0
    %824 = vmatpush1.msra.mxu0 0.0
    %825 = vmatprep.subr.mxu0 0.0
    %826 = vmatpush1.msra.mxu0 0.0
    %827 = vmatprep.subr.mxu0 0.0
    %828 = vmatpush1.msra.mxu0 0.0
    %829 = vmatprep.subr.mxu0 0.0
    %830 = vmatpush1.msra.mxu0 0.0
    %831 = vmatprep.subr.mxu0 0.0
    %832 = vmatpush1.msra.mxu0 0.0
    %833 = vmatprep.subr.mxu0 0.0
    %834 = vmatpush1.msra.mxu0 0.0
    %835 = vmatprep.subr.mxu0 0.0
    %836 = vmatpush1.msra.mxu0 0.0
    %837 = vmatprep.subr.mxu0 0.0
    %838 = vmatpush1.msra.mxu0 0.0
    %839 = vmatprep.subr.mxu0 0.0
    %840 = vmatpush1.msra.mxu0 0.0
    %841 = vmatprep.subr.mxu0 0.0
    %842 = vmatpush1.msra.mxu0 0.0
    %843 = vmatprep.subr.mxu0 0.0
    %844 = vmatpush1.msra.mxu0 0.0
    %845 = vmatprep.subr.mxu0 0.0
    %846 = vmatpush1.msra.mxu0 0.0
    %847 = vmatprep.subr.mxu0 0.0
    %848 = vmatpush1.msra.mxu0 0.0
    %849 = vmatprep.subr.mxu0 0.0
    %850 = vmatpush1.msra.mxu0 0.0
    %851 = vmatprep.subr.mxu0 0.0
    %852 = vmatpush1.msra.mxu0 0.0
    %853 = vmatprep.subr.mxu0 0.0
    %854 = vmatpush1.msra.mxu0 0.0
    %855 = vmatprep.subr.mxu0 0.0
    %856 = vmatpush1.msra.mxu0 0.0
    %857 = vmatprep.subr.mxu0 0.0
    %858 = vmatpush1.msra.mxu0 0.0
    %859 = vmatprep.subr.mxu0 0.0
    %860 = vmatpush1.msra.mxu0 0.0
    %861 = vmatprep.subr.mxu0 0.0
    %862 = vmatpush1.msra.mxu0 0.0
    %863 = vmatprep.subr.mxu0 0.0
    %864 = vmatpush1.msra.mxu0 0.0
    %865 = vmatprep.subr.mxu0 0.0
    %866 = vmatpush1.msra.mxu0 0.0
    %867 = vmatprep.subr.mxu0 0.0
    %868 = vmatpush1.msra.mxu0 0.0
    %869 = vmatprep.subr.mxu0 0.0
    %870 = vmatpush1.msra.mxu0 0.0
    %871 = vmatprep.mubr.f32.mxu0 0.0
    %872 = vmatmul.mubr.f32.gmra.mrb[0].mxu0 %v805
    %v873 = vpop.f32.mrb[0].mxu0
    %v874 = vadd.f32 0.0, %v873
    %v875 = vpop.f32.mrb[0].mxu0
    %876 = vdwg.mxu0
    %v878 = vrot.slane %v874, 4
    %v880 = vadd.f32 %v135, %v878
    %v881 = vxor.u32 %v880, 2147483648
    %v882 = vmul.f32 %v881, 1.442695
    %v883 = vpow.pop %v882
    %v884 = vadd.f32 %v883, 1.0
    %v885 = vrcp.pop %v884
    %v886 = vmul.f32 1.0, %v885
    %v887 = vtanh.pop %v880
    %v889 = vrot.slane %v790, 6
    %v891 = vmul.f32 %v886, %v889
    %893 = vrot.lane.b32.xlu0 %v887, 64
    %v894 = vpop.permute.xlu0 %893
    %v896 = vmul.f32 %v886, %v894
    %898 = vrot.lane.b32.xlu0 %v896, 32
    %v899 = vpop.permute.xlu0 %898
    %v901 = vadd.f32 %v891, %v899
    %v902 = vtanh.pop %v901
    %904 = vrot.lane.b32.xlu0 %v902, 64
    %v905 = vpop.permute.xlu0 %904
    %v907 = vmul.f32 %v886, %v905
    %909 = vrot.lane.b32.xlu0 %v907, 32
    %v910 = vpop.permute.xlu0 %909
    %912 = vst.msk [vmem:[#allocation2 + $0x8] sm:$0x30] %vm472, %v910
    %v913 = vrot.slane %v907, 4
    %914 = vrot.lane.b32.xlu0 %v913, 32
    %v915 = vpop.permute.xlu0 %914
    %v916 = vsel %vm144, %v915, 0
    %918 = vmatprep.subr.mxu0 0.0
    %919 = vmatpush1.msra.mxu0 %v138
    %920 = vmatprep.subr.mxu0 0.0
    %921 = vmatpush1.msra.mxu0 %v139
    %922 = vmatprep.subr.mxu0 0.0
    %923 = vmatpush1.msra.mxu0 %v140
    %924 = vmatprep.subr.mxu0 0.0
    %925 = vmatpush1.msra.mxu0 %v141
    %926 = vmatprep.subr.mxu0 0.0
    %927 = vmatpush1.msra.mxu0 0.0
    %928 = vmatprep.subr.mxu0 0.0
    %929 = vmatpush1.msra.mxu0 0.0
    %930 = vmatprep.subr.mxu0 0.0
    %931 = vmatpush1.msra.mxu0 0.0
    %932 = vmatprep.subr.mxu0 0.0
    %933 = vmatpush1.msra.mxu0 0.0
    %934 = vmatprep.subr.mxu0 0.0
    %935 = vmatpush1.msra.mxu0 0.0
    %936 = vmatprep.subr.mxu0 0.0
    %937 = vmatpush1.msra.mxu0 0.0
    %938 = vmatprep.subr.mxu0 0.0
    %939 = vmatpush1.msra.mxu0 0.0
    %940 = vmatprep.subr.mxu0 0.0
    %941 = vmatpush1.msra.mxu0 0.0
    %942 = vmatprep.subr.mxu0 0.0
    %943 = vmatpush1.msra.mxu0 0.0
    %944 = vmatprep.subr.mxu0 0.0
    %945 = vmatpush1.msra.mxu0 0.0
    %946 = vmatprep.subr.mxu0 0.0
    %947 = vmatpush1.msra.mxu0 0.0
    %948 = vmatprep.subr.mxu0 0.0
    %949 = vmatpush1.msra.mxu0 0.0
    %950 = vmatprep.subr.mxu0 0.0
    %951 = vmatpush1.msra.mxu0 0.0
    %952 = vmatprep.subr.mxu0 0.0
    %953 = vmatpush1.msra.mxu0 0.0
    %954 = vmatprep.subr.mxu0 0.0
    %955 = vmatpush1.msra.mxu0 0.0
    %956 = vmatprep.subr.mxu0 0.0
    %957 = vmatpush1.msra.mxu0 0.0
    %958 = vmatprep.subr.mxu0 0.0
    %959 = vmatpush1.msra.mxu0 0.0
    %960 = vmatprep.subr.mxu0 0.0
    %961 = vmatpush1.msra.mxu0 0.0
    %962 = vmatprep.subr.mxu0 0.0
    %963 = vmatpush1.msra.mxu0 0.0
    %964 = vmatprep.subr.mxu0 0.0
    %965 = vmatpush1.msra.mxu0 0.0
    %966 = vmatprep.subr.mxu0 0.0
    %967 = vmatpush1.msra.mxu0 0.0
    %968 = vmatprep.subr.mxu0 0.0
    %969 = vmatpush1.msra.mxu0 0.0
    %970 = vmatprep.subr.mxu0 0.0
    %971 = vmatpush1.msra.mxu0 0.0
    %972 = vmatprep.subr.mxu0 0.0
    %973 = vmatpush1.msra.mxu0 0.0
    %974 = vmatprep.subr.mxu0 0.0
    %975 = vmatpush1.msra.mxu0 0.0
    %976 = vmatprep.subr.mxu0 0.0
    %977 = vmatpush1.msra.mxu0 0.0
    %978 = vmatprep.subr.mxu0 0.0
    %979 = vmatpush1.msra.mxu0 0.0
    %980 = vmatprep.subr.mxu0 0.0
    %981 = vmatpush1.msra.mxu0 0.0
    %982 = vmatprep.mubr.f32.mxu0 0.0
    %983 = vmatmul.mubr.f32.gmra.mrb[0].mxu0 %v916
    %v984 = vpop.f32.mrb[0].mxu0
    %v985 = vadd.f32 0.0, %v984
    %v986 = vpop.f32.mrb[0].mxu0
    %987 = vdwg.mxu0
    %v989 = vrot.slane %v985, 2
    %v991 = vadd.f32 %v135, %v989
    %v992 = vxor.u32 %v991, 2147483648
    %v993 = vmul.f32 %v992, 1.442695
    %v994 = vpow.pop %v993
    %v995 = vadd.f32 %v994, 1.0
    %v996 = vrcp.pop %v995
    %v997 = vmul.f32 1.0, %v996
    %v998 = vtanh.pop %v991
    %v1000 = vrot.slane %v901, 6
    %v1002 = vmul.f32 %v997, %v1000
    %1004 = vrot.lane.b32.xlu0 %v998, 64
    %v1005 = vpop.permute.xlu0 %1004
    %v1007 = vmul.f32 %v997, %v1005
    %1009 = vrot.lane.b32.xlu0 %v1007, 32
    %v1010 = vpop.permute.xlu0 %1009
    %v1012 = vadd.f32 %v1002, %v1010
    %v1013 = vtanh.pop %v1012
    %1015 = vrot.lane.b32.xlu0 %v1013, 64
    %v1016 = vpop.permute.xlu0 %1015
    %v1018 = vmul.f32 %v997, %v1016
    %1020 = vrot.lane.b32.xlu0 %v1018, 32
    %v1021 = vpop.permute.xlu0 %1020
    %1023 = vst.msk [vmem:[#allocation2 + $0x8] sm:$0xc0] %vm584, %v1021
    %1024 = vst.msk [vmem:[#allocation4 - $0x6] sm:$0xc0] %vm584, %v1021
    %1026 = vrot.lane.b32.xlu0 %v1012, 96
    %v1027 = vpop.permute.xlu0 %1026
    %1029 = vst.msk [vmem:[#allocation6 - $0x6] sm:$0xc0] %vm584, %v1027
    %v1030 = vld [vmem:[#allocation2] sm:$0xff]
    %v1031 = vld [vmem:[#allocation2 + $0x8] sm:$0xff]
    %v1032 = vld [vmem:[%s4] sm:$0xff]
    %v1033 = vld [vmem:[%s4 + $0x8] sm:$0xff]
    %v1034 = vld [vmem:[%s4 + $0x10] sm:$0xff]
    %v1035 = vld [vmem:[%s4 + $0x18] sm:$0xff]
    %v1036 = vld [vmem:[%s6] sm:$0x1]
    %v1038 = vlaneseq
    %v1039 = vshrl.u32 %v1038, 7
    %v1040 = vsub.s32 0, %v1039
    %v1041 = vrot.slane %v1036, %v1040
    %v1044 = vsel %vm144, %v1030, 0
    %v1047 = vsel %vm144, %v1031, 0
    %1049 = vmatprep.subr.mxu0 0.0
    %1050 = vmatpush1.msra.mxu0 %v1032
    %1051 = vmatprep.subr.mxu0 0.0
    %1052 = vmatpush1.msra.mxu0 %v1033
    %1053 = vmatprep.subr.mxu0 0.0
    %1054 = vmatpush1.msra.mxu0 %v1034
    %1055 = vmatprep.subr.mxu0 0.0
    %1056 = vmatpush1.msra.mxu0 %v1035
    %1057 = vmatprep.subr.mxu0 0.0
    %1058 = vmatpush1.msra.mxu0 0.0
    %1059 = vmatprep.subr.mxu0 0.0
    %1060 = vmatpush1.msra.mxu0 0.0
    %1061 = vmatprep.subr.mxu0 0.0
    %1062 = vmatpush1.msra.mxu0 0.0
    %1063 = vmatprep.subr.mxu0 0.0
    %1064 = vmatpush1.msra.mxu0 0.0
    %1065 = vmatprep.subr.mxu0 0.0
    %1066 = vmatpush1.msra.mxu0 0.0
    %1067 = vmatprep.subr.mxu0 0.0
    %1068 = vmatpush1.msra.mxu0 0.0
    %1069 = vmatprep.subr.mxu0 0.0
    %1070 = vmatpush1.msra.mxu0 0.0
    %1071 = vmatprep.subr.mxu0 0.0
    %1072 = vmatpush1.msra.mxu0 0.0
    %1073 = vmatprep.subr.mxu0 0.0
    %1074 = vmatpush1.msra.mxu0 0.0
    %1075 = vmatprep.subr.mxu0 0.0
    %1076 = vmatpush1.msra.mxu0 0.0
    %1077 = vmatprep.subr.mxu0 0.0
    %1078 = vmatpush1.msra.mxu0 0.0
    %1079 = vmatprep.subr.mxu0 0.0
    %1080 = vmatpush1.msra.mxu0 0.0
    %1081 = vmatprep.subr.mxu0 0.0
    %1082 = vmatpush1.msra.mxu0 0.0
    %1083 = vmatprep.subr.mxu0 0.0
    %1084 = vmatpush1.msra.mxu0 0.0
    %1085 = vmatprep.subr.mxu0 0.0
    %1086 = vmatpush1.msra.mxu0 0.0
    %1087 = vmatprep.subr.mxu0 0.0
    %1088 = vmatpush1.msra.mxu0 0.0
    %1089 = vmatprep.subr.mxu0 0.0
    %1090 = vmatpush1.msra.mxu0 0.0
    %1091 = vmatprep.subr.mxu0 0.0
    %1092 = vmatpush1.msra.mxu0 0.0
    %1093 = vmatprep.subr.mxu0 0.0
    %1094 = vmatpush1.msra.mxu0 0.0
    %1095 = vmatprep.subr.mxu0 0.0
    %1096 = vmatpush1.msra.mxu0 0.0
    %1097 = vmatprep.subr.mxu0 0.0
    %1098 = vmatpush1.msra.mxu0 0.0
    %1099 = vmatprep.subr.mxu0 0.0
    %1100 = vmatpush1.msra.mxu0 0.0
    %1101 = vmatprep.subr.mxu0 0.0
    %1102 = vmatpush1.msra.mxu0 0.0
    %1103 = vmatprep.subr.mxu0 0.0
    %1104 = vmatpush1.msra.mxu0 0.0
    %1105 = vmatprep.subr.mxu0 0.0
    %1106 = vmatpush1.msra.mxu0 0.0
    %1107 = vmatprep.subr.mxu0 0.0
    %1108 = vmatpush1.msra.mxu0 0.0
    %1109 = vmatprep.subr.mxu0 0.0
    %1110 = vmatpush1.msra.mxu0 0.0
    %1111 = vmatprep.subr.mxu0 0.0
    %1112 = vmatpush1.msra.mxu0 0.0
    %1113 = vmatprep.mubr.f32.mxu0 0.0
    %1114 = vmatmul.mubr.f32.gmra.mrb[0].mxu0 %v1044
    %v1115 = vpop.f32.mrb[0].mxu0
    %v1116 = vadd.f32 %v1041, %v1115
    %v1117 = vpop.f32.mrb[0].mxu0
    %1118 = vmatprep.mubr.f32.mxu0 0.0
    %1119 = vmatmul.mubr.f32.gmra.mrb[0].mxu0 %v1047
    %v1120 = vpop.f32.mrb[0].mxu0
    %v1121 = vadd.f32 %v1041, %v1120
    %v1122 = vpop.f32.mrb[0].mxu0
    %1123 = vdwg.mxu0
    %v1124 = vld [vmem:[%s5] sm:$0xff]
    %v1125 = vld [vmem:[%s5 + $0x8] sm:$0xff]
    %v1126 = vld [vmem:[%s5 + $0x10] sm:$0xff]
    %v1127 = vld [vmem:[%s5 + $0x18] sm:$0xff]
    %s1128 = scalar_lea.vmem %s7, 2
    %v1129 = vld [vmem:[%s1128] sm:$0x3]
    %s1130 = scalar_lea.vmem %s8, 2
    %v1131 = vld [vmem:[%s1130] sm:$0x3]
    %v1133 = vsel %vm144, %v1129, 0
    %1135 = vmatprep.subr.mxu0 0.0
    %1136 = vmatpush1.msra.mxu0 %v1124
    %1137 = vmatprep.subr.mxu0 0.0
    %1138 = vmatpush1.msra.mxu0 %v1125
    %1139 = vmatprep.subr.mxu0 0.0
    %1140 = vmatpush1.msra.mxu0 %v1126
    %1141 = vmatprep.subr.mxu0 0.0
    %1142 = vmatpush1.msra.mxu0 %v1127
    %1143 = vmatprep.subr.mxu0 0.0
    %1144 = vmatpush1.msra.mxu0 0.0
    %1145 = vmatprep.subr.mxu0 0.0
    %1146 = vmatpush1.msra.mxu0 0.0
    %1147 = vmatprep.subr.mxu0 0.0
    %1148 = vmatpush1.msra.mxu0 0.0
    %1149 = vmatprep.subr.mxu0 0.0
    %1150 = vmatpush1.msra.mxu0 0.0
    %1151 = vmatprep.subr.mxu0 0.0
    %1152 = vmatpush1.msra.mxu0 0.0
    %1153 = vmatprep.subr.mxu0 0.0
    %1154 = vmatpush1.msra.mxu0 0.0
    %1155 = vmatprep.subr.mxu0 0.0
    %1156 = vmatpush1.msra.mxu0 0.0
    %1157 = vmatprep.subr.mxu0 0.0
    %1158 = vmatpush1.msra.mxu0 0.0
    %1159 = vmatprep.subr.mxu0 0.0
    %1160 = vmatpush1.msra.mxu0 0.0
    %1161 = vmatprep.subr.mxu0 0.0
    %1162 = vmatpush1.msra.mxu0 0.0
    %1163 = vmatprep.subr.mxu0 0.0
    %1164 = vmatpush1.msra.mxu0 0.0
    %1165 = vmatprep.subr.mxu0 0.0
    %1166 = vmatpush1.msra.mxu0 0.0
    %1167 = vmatprep.subr.mxu0 0.0
    %1168 = vmatpush1.msra.mxu0 0.0
    %1169 = vmatprep.subr.mxu0 0.0
    %1170 = vmatpush1.msra.mxu0 0.0
    %1171 = vmatprep.subr.mxu0 0.0
    %1172 = vmatpush1.msra.mxu0 0.0
    %1173 = vmatprep.subr.mxu0 0.0
    %1174 = vmatpush1.msra.mxu0 0.0
    %1175 = vmatprep.subr.mxu0 0.0
    %1176 = vmatpush1.msra.mxu0 0.0
    %1177 = vmatprep.subr.mxu0 0.0
    %1178 = vmatpush1.msra.mxu0 0.0
    %1179 = vmatprep.subr.mxu0 0.0
    %1180 = vmatpush1.msra.mxu0 0.0
    %1181 = vmatprep.subr.mxu0 0.0
    %1182 = vmatpush1.msra.mxu0 0.0
    %1183 = vmatprep.subr.mxu0 0.0
    %1184 = vmatpush1.msra.mxu0 0.0
    %1185 = vmatprep.subr.mxu0 0.0
    %1186 = vmatpush1.msra.mxu0 0.0
    %1187 = vmatprep.subr.mxu0 0.0
    %1188 = vmatpush1.msra.mxu0 0.0
    %1189 = vmatprep.subr.mxu0 0.0
    %1190 = vmatpush1.msra.mxu0 0.0
    %1191 = vmatprep.subr.mxu0 0.0
    %1192 = vmatpush1.msra.mxu0 0.0
    %1193 = vmatprep.subr.mxu0 0.0
    %1194 = vmatpush1.msra.mxu0 0.0
    %1195 = vmatprep.subr.mxu0 0.0
    %1196 = vmatpush1.msra.mxu0 0.0
    %1197 = vmatprep.subr.mxu0 0.0
    %1198 = vmatpush1.msra.mxu0 0.0
    %1199 = vmatprep.mubr.f32.mxu0 0.0
    %1200 = vmatmul.mubr.f32.gmra.mrb[0].mxu0 %v1133
    %v1201 = vpop.f32.mrb[0].mxu0
    %v1202 = vadd.f32 0.0, %v1201
    %v1203 = vpop.f32.mrb[0].mxu0
    %1204 = vdwg.mxu0
    %v1205 = vadd.f32 %v1116, %v1202
    %v1206 = vxor.u32 %v1205, 2147483648
    %v1207 = vmul.f32 %v1206, 1.442695
    %v1208 = vpow.pop %v1207
    %v1209 = vadd.f32 %v1208, 1.0
    %v1210 = vrcp.pop %v1209
    %v1211 = vmul.f32 1.0, %v1210
    %v1212 = vtanh.pop %v1205
    %1214 = vrot.lane.b32.xlu0 %v1131, 32
    %v1215 = vpop.permute.xlu0 %1214
    %v1217 = vmul.f32 %v1211, %v1215
    %1219 = vrot.lane.b32.xlu0 %v1212, 64
    %v1220 = vpop.permute.xlu0 %1219
    %v1222 = vmul.f32 %v1211, %v1220
    %1224 = vrot.lane.b32.xlu0 %v1222, 32
    %v1225 = vpop.permute.xlu0 %1224
    %v1227 = vadd.f32 %v1217, %v1225
    %v1228 = vtanh.pop %v1227
    %1230 = vrot.lane.b32.xlu0 %v1228, 64
    %v1231 = vpop.permute.xlu0 %1230
    %v1233 = vmul.f32 %v1211, %v1231
    %1235 = vrot.lane.b32.xlu0 %v1233, 32
    %v1236 = vpop.permute.xlu0 %1235
    %v1237 = vsel %vm144, %v1236, 0
    %1239 = vmatprep.subr.mxu0 0.0
    %1240 = vmatpush1.msra.mxu0 %v1124
    %1241 = vmatprep.subr.mxu0 0.0
    %1242 = vmatpush1.msra.mxu0 %v1125
    %1243 = vmatprep.subr.mxu0 0.0
    %1244 = vmatpush1.msra.mxu0 %v1126
    %1245 = vmatprep.subr.mxu0 0.0
    %1246 = vmatpush1.msra.mxu0 %v1127
    %1247 = vmatprep.subr.mxu0 0.0
    %1248 = vmatpush1.msra.mxu0 0.0
    %1249 = vmatprep.subr.mxu0 0.0
    %1250 = vmatpush1.msra.mxu0 0.0
    %1251 = vmatprep.subr.mxu0 0.0
    %1252 = vmatpush1.msra.mxu0 0.0
    %1253 = vmatprep.subr.mxu0 0.0
    %1254 = vmatpush1.msra.mxu0 0.0
    %1255 = vmatprep.subr.mxu0 0.0
    %1256 = vmatpush1.msra.mxu0 0.0
    %1257 = vmatprep.subr.mxu0 0.0
    %1258 = vmatpush1.msra.mxu0 0.0
    %1259 = vmatprep.subr.mxu0 0.0
    %1260 = vmatpush1.msra.mxu0 0.0
    %1261 = vmatprep.subr.mxu0 0.0
    %1262 = vmatpush1.msra.mxu0 0.0
    %1263 = vmatprep.subr.mxu0 0.0
    %1264 = vmatpush1.msra.mxu0 0.0
    %1265 = vmatprep.subr.mxu0 0.0
    %1266 = vmatpush1.msra.mxu0 0.0
    %1267 = vmatprep.subr.mxu0 0.0
    %1268 = vmatpush1.msra.mxu0 0.0
    %1269 = vmatprep.subr.mxu0 0.0
    %1270 = vmatpush1.msra.mxu0 0.0
    %1271 = vmatprep.subr.mxu0 0.0
    %1272 = vmatpush1.msra.mxu0 0.0
    %1273 = vmatprep.subr.mxu0 0.0
    %1274 = vmatpush1.msra.mxu0 0.0
    %1275 = vmatprep.subr.mxu0 0.0
    %1276 = vmatpush1.msra.mxu0 0.0
    %1277 = vmatprep.subr.mxu0 0.0
    %1278 = vmatpush1.msra.mxu0 0.0
    %1279 = vmatprep.subr.mxu0 0.0
    %1280 = vmatpush1.msra.mxu0 0.0
    %1281 = vmatprep.subr.mxu0 0.0
    %1282 = vmatpush1.msra.mxu0 0.0
    %1283 = vmatprep.subr.mxu0 0.0
    %1284 = vmatpush1.msra.mxu0 0.0
    %1285 = vmatprep.subr.mxu0 0.0
    %1286 = vmatpush1.msra.mxu0 0.0
    %1287 = vmatprep.subr.mxu0 0.0
    %1288 = vmatpush1.msra.mxu0 0.0
    %1289 = vmatprep.subr.mxu0 0.0
    %1290 = vmatpush1.msra.mxu0 0.0
    %1291 = vmatprep.subr.mxu0 0.0
    %1292 = vmatpush1.msra.mxu0 0.0
    %1293 = vmatprep.subr.mxu0 0.0
    %1294 = vmatpush1.msra.mxu0 0.0
    %1295 = vmatprep.subr.mxu0 0.0
    %1296 = vmatpush1.msra.mxu0 0.0
    %1297 = vmatprep.subr.mxu0 0.0
    %1298 = vmatpush1.msra.mxu0 0.0
    %1299 = vmatprep.subr.mxu0 0.0
    %1300 = vmatpush1.msra.mxu0 0.0
    %1301 = vmatprep.subr.mxu0 0.0
    %1302 = vmatpush1.msra.mxu0 0.0
    %1303 = vmatprep.mubr.f32.mxu0 0.0
    %1304 = vmatmul.mubr.f32.gmra.mrb[0].mxu0 %v1237
    %v1305 = vpop.f32.mrb[0].mxu0
    %v1306 = vadd.f32 0.0, %v1305
    %v1307 = vpop.f32.mrb[0].mxu0
    %1308 = vdwg.mxu0
    %v1310 = vrot.slane %v1306, 6
    %v1312 = vadd.f32 %v1116, %v1310
    %v1313 = vxor.u32 %v1312, 2147483648
    %v1314 = vmul.f32 %v1313, 1.442695
    %v1315 = vpow.pop %v1314
    %v1316 = vadd.f32 %v1315, 1.0
    %v1317 = vrcp.pop %v1316
    %v1318 = vmul.f32 1.0, %v1317
    %v1319 = vtanh.pop %v1312
    %v1321 = vrot.slane %v1227, 6
    %v1323 = vmul.f32 %v1318, %v1321
    %1325 = vrot.lane.b32.xlu0 %v1319, 64
    %v1326 = vpop.permute.xlu0 %1325
    %v1328 = vmul.f32 %v1318, %v1326
    %1330 = vrot.lane.b32.xlu0 %v1328, 32
    %v1331 = vpop.permute.xlu0 %1330
    %v1333 = vadd.f32 %v1323, %v1331
    %v1334 = vtanh.pop %v1333
    %1336 = vrot.lane.b32.xlu0 %v1334, 64
    %v1337 = vpop.permute.xlu0 %1336
    %v1339 = vmul.f32 %v1318, %v1337
    %v1341 = vrot.slane %v1339, 2
    %1342 = vrot.lane.b32.xlu0 %v1341, 32
    %v1343 = vpop.permute.xlu0 %1342
    %v1344 = vsel %vm144, %v1343, 0
    %1346 = vmatprep.subr.mxu0 0.0
    %1347 = vmatpush1.msra.mxu0 %v1124
    %1348 = vmatprep.subr.mxu0 0.0
    %1349 = vmatpush1.msra.mxu0 %v1125
    %1350 = vmatprep.subr.mxu0 0.0
    %1351 = vmatpush1.msra.mxu0 %v1126
    %1352 = vmatprep.subr.mxu0 0.0
    %1353 = vmatpush1.msra.mxu0 %v1127
    %1354 = vmatprep.subr.mxu0 0.0
    %1355 = vmatpush1.msra.mxu0 0.0
    %1356 = vmatprep.subr.mxu0 0.0
    %1357 = vmatpush1.msra.mxu0 0.0
    %1358 = vmatprep.subr.mxu0 0.0
    %1359 = vmatpush1.msra.mxu0 0.0
    %1360 = vmatprep.subr.mxu0 0.0
    %1361 = vmatpush1.msra.mxu0 0.0
    %1362 = vmatprep.subr.mxu0 0.0
    %1363 = vmatpush1.msra.mxu0 0.0
    %1364 = vmatprep.subr.mxu0 0.0
    %1365 = vmatpush1.msra.mxu0 0.0
    %1366 = vmatprep.subr.mxu0 0.0
    %1367 = vmatpush1.msra.mxu0 0.0
    %1368 = vmatprep.subr.mxu0 0.0
    %1369 = vmatpush1.msra.mxu0 0.0
    %1370 = vmatprep.subr.mxu0 0.0
    %1371 = vmatpush1.msra.mxu0 0.0
    %1372 = vmatprep.subr.mxu0 0.0
    %1373 = vmatpush1.msra.mxu0 0.0
    %1374 = vmatprep.subr.mxu0 0.0
    %1375 = vmatpush1.msra.mxu0 0.0
    %1376 = vmatprep.subr.mxu0 0.0
    %1377 = vmatpush1.msra.mxu0 0.0
    %1378 = vmatprep.subr.mxu0 0.0
    %1379 = vmatpush1.msra.mxu0 0.0
    %1380 = vmatprep.subr.mxu0 0.0
    %1381 = vmatpush1.msra.mxu0 0.0
    %1382 = vmatprep.subr.mxu0 0.0
    %1383 = vmatpush1.msra.mxu0 0.0
    %1384 = vmatprep.subr.mxu0 0.0
    %1385 = vmatpush1.msra.mxu0 0.0
    %1386 = vmatprep.subr.mxu0 0.0
    %1387 = vmatpush1.msra.mxu0 0.0
    %1388 = vmatprep.subr.mxu0 0.0
    %1389 = vmatpush1.msra.mxu0 0.0
    %1390 = vmatprep.subr.mxu0 0.0
    %1391 = vmatpush1.msra.mxu0 0.0
    %1392 = vmatprep.subr.mxu0 0.0
    %1393 = vmatpush1.msra.mxu0 0.0
    %1394 = vmatprep.subr.mxu0 0.0
    %1395 = vmatpush1.msra.mxu0 0.0
    %1396 = vmatprep.subr.mxu0 0.0
    %1397 = vmatpush1.msra.mxu0 0.0
    %1398 = vmatprep.subr.mxu0 0.0
    %1399 = vmatpush1.msra.mxu0 0.0
    %1400 = vmatprep.subr.mxu0 0.0
    %1401 = vmatpush1.msra.mxu0 0.0
    %1402 = vmatprep.subr.mxu0 0.0
    %1403 = vmatpush1.msra.mxu0 0.0
    %1404 = vmatprep.subr.mxu0 0.0
    %1405 = vmatpush1.msra.mxu0 0.0
    %1406 = vmatprep.subr.mxu0 0.0
    %1407 = vmatpush1.msra.mxu0 0.0
    %1408 = vmatprep.subr.mxu0 0.0
    %1409 = vmatpush1.msra.mxu0 0.0
    %1410 = vmatprep.mubr.f32.mxu0 0.0
    %1411 = vmatmul.mubr.f32.gmra.mrb[0].mxu0 %v1344
    %v1412 = vpop.f32.mrb[0].mxu0
    %v1413 = vadd.f32 0.0, %v1412
    %v1414 = vpop.f32.mrb[0].mxu0
    %1415 = vdwg.mxu0
    %v1417 = vrot.slane %v1413, 4
    %v1419 = vadd.f32 %v1116, %v1417
    %v1420 = vxor.u32 %v1419, 2147483648
    %v1421 = vmul.f32 %v1420, 1.442695
    %v1422 = vpow.pop %v1421
    %v1423 = vadd.f32 %v1422, 1.0
    %v1424 = vrcp.pop %v1423
    %v1425 = vmul.f32 1.0, %v1424
    %v1426 = vtanh.pop %v1419
    %v1428 = vrot.slane %v1333, 6
    %v1430 = vmul.f32 %v1425, %v1428
    %1432 = vrot.lane.b32.xlu0 %v1426, 64
    %v1433 = vpop.permute.xlu0 %1432
    %v1435 = vmul.f32 %v1425, %v1433
    %1437 = vrot.lane.b32.xlu0 %v1435, 32
    %v1438 = vpop.permute.xlu0 %1437
    %v1440 = vadd.f32 %v1430, %v1438
    %v1441 = vtanh.pop %v1440
    %1443 = vrot.lane.b32.xlu0 %v1441, 64
    %v1444 = vpop.permute.xlu0 %1443
    %v1446 = vmul.f32 %v1425, %v1444
    %v1448 = vrot.slane %v1446, 4
    %1449 = vrot.lane.b32.xlu0 %v1448, 32
    %v1450 = vpop.permute.xlu0 %1449
    %v1451 = vsel %vm144, %v1450, 0
    %1453 = vmatprep.subr.mxu0 0.0
    %1454 = vmatpush1.msra.mxu0 %v1124
    %1455 = vmatprep.subr.mxu0 0.0
    %1456 = vmatpush1.msra.mxu0 %v1125
    %1457 = vmatprep.subr.mxu0 0.0
    %1458 = vmatpush1.msra.mxu0 %v1126
    %1459 = vmatprep.subr.mxu0 0.0
    %1460 = vmatpush1.msra.mxu0 %v1127
    %1461 = vmatprep.subr.mxu0 0.0
    %1462 = vmatpush1.msra.mxu0 0.0
    %1463 = vmatprep.subr.mxu0 0.0
    %1464 = vmatpush1.msra.mxu0 0.0
    %1465 = vmatprep.subr.mxu0 0.0
    %1466 = vmatpush1.msra.mxu0 0.0
    %1467 = vmatprep.subr.mxu0 0.0
    %1468 = vmatpush1.msra.mxu0 0.0
    %1469 = vmatprep.subr.mxu0 0.0
    %1470 = vmatpush1.msra.mxu0 0.0
    %1471 = vmatprep.subr.mxu0 0.0
    %1472 = vmatpush1.msra.mxu0 0.0
    %1473 = vmatprep.subr.mxu0 0.0
    %1474 = vmatpush1.msra.mxu0 0.0
    %1475 = vmatprep.subr.mxu0 0.0
    %1476 = vmatpush1.msra.mxu0 0.0
    %1477 = vmatprep.subr.mxu0 0.0
    %1478 = vmatpush1.msra.mxu0 0.0
    %1479 = vmatprep.subr.mxu0 0.0
    %1480 = vmatpush1.msra.mxu0 0.0
    %1481 = vmatprep.subr.mxu0 0.0
    %1482 = vmatpush1.msra.mxu0 0.0
    %1483 = vmatprep.subr.mxu0 0.0
    %1484 = vmatpush1.msra.mxu0 0.0
    %1485 = vmatprep.subr.mxu0 0.0
    %1486 = vmatpush1.msra.mxu0 0.0
    %1487 = vmatprep.subr.mxu0 0.0
    %1488 = vmatpush1.msra.mxu0 0.0
    %1489 = vmatprep.subr.mxu0 0.0
    %1490 = vmatpush1.msra.mxu0 0.0
    %1491 = vmatprep.subr.mxu0 0.0
    %1492 = vmatpush1.msra.mxu0 0.0
    %1493 = vmatprep.subr.mxu0 0.0
    %1494 = vmatpush1.msra.mxu0 0.0
    %1495 = vmatprep.subr.mxu0 0.0
    %1496 = vmatpush1.msra.mxu0 0.0
    %1497 = vmatprep.subr.mxu0 0.0
    %1498 = vmatpush1.msra.mxu0 0.0
    %1499 = vmatprep.subr.mxu0 0.0
    %1500 = vmatpush1.msra.mxu0 0.0
    %1501 = vmatprep.subr.mxu0 0.0
    %1502 = vmatpush1.msra.mxu0 0.0
    %1503 = vmatprep.subr.mxu0 0.0
    %1504 = vmatpush1.msra.mxu0 0.0
    %1505 = vmatprep.subr.mxu0 0.0
    %1506 = vmatpush1.msra.mxu0 0.0
    %1507 = vmatprep.subr.mxu0 0.0
    %1508 = vmatpush1.msra.mxu0 0.0
    %1509 = vmatprep.subr.mxu0 0.0
    %1510 = vmatpush1.msra.mxu0 0.0
    %1511 = vmatprep.subr.mxu0 0.0
    %1512 = vmatpush1.msra.mxu0 0.0
    %1513 = vmatprep.subr.mxu0 0.0
    %1514 = vmatpush1.msra.mxu0 0.0
    %1515 = vmatprep.subr.mxu0 0.0
    %1516 = vmatpush1.msra.mxu0 0.0
    %1517 = vmatprep.mubr.f32.mxu0 0.0
    %1518 = vmatmul.mubr.f32.gmra.mrb[0].mxu0 %v1451
    %v1519 = vpop.f32.mrb[0].mxu0
    %v1520 = vadd.f32 0.0, %v1519
    %v1521 = vpop.f32.mrb[0].mxu0
    %1522 = vdwg.mxu0
    %v1524 = vrot.slane %v1520, 2
    %v1526 = vadd.f32 %v1116, %v1524
    %v1527 = vxor.u32 %v1526, 2147483648
    %v1528 = vmul.f32 %v1527, 1.442695
    %v1529 = vpow.pop %v1528
    %v1530 = vadd.f32 %v1529, 1.0
    %v1531 = vrcp.pop %v1530
    %v1532 = vmul.f32 1.0, %v1531
    %v1533 = vtanh.pop %v1526
    %v1535 = vrot.slane %v1440, 6
    %v1537 = vmul.f32 %v1532, %v1535
    %1539 = vrot.lane.b32.xlu0 %v1533, 64
    %v1540 = vpop.permute.xlu0 %1539
    %v1542 = vmul.f32 %v1532, %v1540
    %1544 = vrot.lane.b32.xlu0 %v1542, 32
    %v1545 = vpop.permute.xlu0 %1544
    %v1547 = vadd.f32 %v1537, %v1545
    %v1548 = vtanh.pop %v1547
    %1550 = vrot.lane.b32.xlu0 %v1548, 64
    %v1551 = vpop.permute.xlu0 %1550
    %v1553 = vmul.f32 %v1532, %v1551
    %v1555 = vrot.slane %v1553, 6
    %1556 = vrot.lane.b32.xlu0 %v1555, 32
    %v1557 = vpop.permute.xlu0 %1556
    %v1558 = vsel %vm144, %v1557, 0
    %1560 = vmatprep.subr.mxu0 0.0
    %1561 = vmatpush1.msra.mxu0 %v1124
    %1562 = vmatprep.subr.mxu0 0.0
    %1563 = vmatpush1.msra.mxu0 %v1125
    %1564 = vmatprep.subr.mxu0 0.0
    %1565 = vmatpush1.msra.mxu0 %v1126
    %1566 = vmatprep.subr.mxu0 0.0
    %1567 = vmatpush1.msra.mxu0 %v1127
    %1568 = vmatprep.subr.mxu0 0.0
    %1569 = vmatpush1.msra.mxu0 0.0
    %1570 = vmatprep.subr.mxu0 0.0
    %1571 = vmatpush1.msra.mxu0 0.0
    %1572 = vmatprep.subr.mxu0 0.0
    %1573 = vmatpush1.msra.mxu0 0.0
    %1574 = vmatprep.subr.mxu0 0.0
    %1575 = vmatpush1.msra.mxu0 0.0
    %1576 = vmatprep.subr.mxu0 0.0
    %1577 = vmatpush1.msra.mxu0 0.0
    %1578 = vmatprep.subr.mxu0 0.0
    %1579 = vmatpush1.msra.mxu0 0.0
    %1580 = vmatprep.subr.mxu0 0.0
    %1581 = vmatpush1.msra.mxu0 0.0
    %1582 = vmatprep.subr.mxu0 0.0
    %1583 = vmatpush1.msra.mxu0 0.0
    %1584 = vmatprep.subr.mxu0 0.0
    %1585 = vmatpush1.msra.mxu0 0.0
    %1586 = vmatprep.subr.mxu0 0.0
    %1587 = vmatpush1.msra.mxu0 0.0
    %1588 = vmatprep.subr.mxu0 0.0
    %1589 = vmatpush1.msra.mxu0 0.0
    %1590 = vmatprep.subr.mxu0 0.0
    %1591 = vmatpush1.msra.mxu0 0.0
    %1592 = vmatprep.subr.mxu0 0.0
    %1593 = vmatpush1.msra.mxu0 0.0
    %1594 = vmatprep.subr.mxu0 0.0
    %1595 = vmatpush1.msra.mxu0 0.0
    %1596 = vmatprep.subr.mxu0 0.0
    %1597 = vmatpush1.msra.mxu0 0.0
    %1598 = vmatprep.subr.mxu0 0.0
    %1599 = vmatpush1.msra.mxu0 0.0
    %1600 = vmatprep.subr.mxu0 0.0
    %1601 = vmatpush1.msra.mxu0 0.0
    %1602 = vmatprep.subr.mxu0 0.0
    %1603 = vmatpush1.msra.mxu0 0.0
    %1604 = vmatprep.subr.mxu0 0.0
    %1605 = vmatpush1.msra.mxu0 0.0
    %1606 = vmatprep.subr.mxu0 0.0
    %1607 = vmatpush1.msra.mxu0 0.0
    %1608 = vmatprep.subr.mxu0 0.0
    %1609 = vmatpush1.msra.mxu0 0.0
    %1610 = vmatprep.subr.mxu0 0.0
    %1611 = vmatpush1.msra.mxu0 0.0
    %1612 = vmatprep.subr.mxu0 0.0
    %1613 = vmatpush1.msra.mxu0 0.0
    %1614 = vmatprep.subr.mxu0 0.0
    %1615 = vmatpush1.msra.mxu0 0.0
    %1616 = vmatprep.subr.mxu0 0.0
    %1617 = vmatpush1.msra.mxu0 0.0
    %1618 = vmatprep.subr.mxu0 0.0
    %1619 = vmatpush1.msra.mxu0 0.0
    %1620 = vmatprep.subr.mxu0 0.0
    %1621 = vmatpush1.msra.mxu0 0.0
    %1622 = vmatprep.subr.mxu0 0.0
    %1623 = vmatpush1.msra.mxu0 0.0
    %1624 = vmatprep.mubr.f32.mxu0 0.0
    %1625 = vmatmul.mubr.f32.gmra.mrb[0].mxu0 %v1558
    %v1626 = vpop.f32.mrb[0].mxu0
    %v1627 = vadd.f32 0.0, %v1626
    %v1628 = vpop.f32.mrb[0].mxu0
    %1629 = vdwg.mxu0
    %v1630 = vadd.f32 %v1121, %v1627
    %v1631 = vxor.u32 %v1630, 2147483648
    %v1632 = vmul.f32 %v1631, 1.442695
    %v1633 = vpow.pop %v1632
    %v1634 = vadd.f32 %v1633, 1.0
    %v1635 = vrcp.pop %v1634
    %v1636 = vmul.f32 1.0, %v1635
    %v1637 = vtanh.pop %v1630
    %v1639 = vrot.slane %v1547, 6
    %v1641 = vmul.f32 %v1636, %v1639
    %1643 = vrot.lane.b32.xlu0 %v1637, 64
    %v1644 = vpop.permute.xlu0 %1643
    %v1646 = vmul.f32 %v1636, %v1644
    %1648 = vrot.lane.b32.xlu0 %v1646, 32
    %v1649 = vpop.permute.xlu0 %1648
    %v1651 = vadd.f32 %v1641, %v1649
    %v1652 = vtanh.pop %v1651
    %1654 = vrot.lane.b32.xlu0 %v1652, 64
    %v1655 = vpop.permute.xlu0 %1654
    %v1657 = vmul.f32 %v1636, %v1655
    %1659 = vrot.lane.b32.xlu0 %v1657, 32
    %v1660 = vpop.permute.xlu0 %1659
    %v1661 = vsel %vm144, %v1660, 0
    %1663 = vmatprep.subr.mxu0 0.0
    %1664 = vmatpush1.msra.mxu0 %v1124
    %1665 = vmatprep.subr.mxu0 0.0
    %1666 = vmatpush1.msra.mxu0 %v1125
    %1667 = vmatprep.subr.mxu0 0.0
    %1668 = vmatpush1.msra.mxu0 %v1126
    %1669 = vmatprep.subr.mxu0 0.0
    %1670 = vmatpush1.msra.mxu0 %v1127
    %1671 = vmatprep.subr.mxu0 0.0
    %1672 = vmatpush1.msra.mxu0 0.0
    %1673 = vmatprep.subr.mxu0 0.0
    %1674 = vmatpush1.msra.mxu0 0.0
    %1675 = vmatprep.subr.mxu0 0.0
    %1676 = vmatpush1.msra.mxu0 0.0
    %1677 = vmatprep.subr.mxu0 0.0
    %1678 = vmatpush1.msra.mxu0 0.0
    %1679 = vmatprep.subr.mxu0 0.0
    %1680 = vmatpush1.msra.mxu0 0.0
    %1681 = vmatprep.subr.mxu0 0.0
    %1682 = vmatpush1.msra.mxu0 0.0
    %1683 = vmatprep.subr.mxu0 0.0
    %1684 = vmatpush1.msra.mxu0 0.0
    %1685 = vmatprep.subr.mxu0 0.0
    %1686 = vmatpush1.msra.mxu0 0.0
    %1687 = vmatprep.subr.mxu0 0.0
    %1688 = vmatpush1.msra.mxu0 0.0
    %1689 = vmatprep.subr.mxu0 0.0
    %1690 = vmatpush1.msra.mxu0 0.0
    %1691 = vmatprep.subr.mxu0 0.0
    %1692 = vmatpush1.msra.mxu0 0.0
    %1693 = vmatprep.subr.mxu0 0.0
    %1694 = vmatpush1.msra.mxu0 0.0
    %1695 = vmatprep.subr.mxu0 0.0
    %1696 = vmatpush1.msra.mxu0 0.0
    %1697 = vmatprep.subr.mxu0 0.0
    %1698 = vmatpush1.msra.mxu0 0.0
    %1699 = vmatprep.subr.mxu0 0.0
    %1700 = vmatpush1.msra.mxu0 0.0
    %1701 = vmatprep.subr.mxu0 0.0
    %1702 = vmatpush1.msra.mxu0 0.0
    %1703 = vmatprep.subr.mxu0 0.0
    %1704 = vmatpush1.msra.mxu0 0.0
    %1705 = vmatprep.subr.mxu0 0.0
    %1706 = vmatpush1.msra.mxu0 0.0
    %1707 = vmatprep.subr.mxu0 0.0
    %1708 = vmatpush1.msra.mxu0 0.0
    %1709 = vmatprep.subr.mxu0 0.0
    %1710 = vmatpush1.msra.mxu0 0.0
    %1711 = vmatprep.subr.mxu0 0.0
    %1712 = vmatpush1.msra.mxu0 0.0
    %1713 = vmatprep.subr.mxu0 0.0
    %1714 = vmatpush1.msra.mxu0 0.0
    %1715 = vmatprep.subr.mxu0 0.0
    %1716 = vmatpush1.msra.mxu0 0.0
    %1717 = vmatprep.subr.mxu0 0.0
    %1718 = vmatpush1.msra.mxu0 0.0
    %1719 = vmatprep.subr.mxu0 0.0
    %1720 = vmatpush1.msra.mxu0 0.0
    %1721 = vmatprep.subr.mxu0 0.0
    %1722 = vmatpush1.msra.mxu0 0.0
    %1723 = vmatprep.subr.mxu0 0.0
    %1724 = vmatpush1.msra.mxu0 0.0
    %1725 = vmatprep.subr.mxu0 0.0
    %1726 = vmatpush1.msra.mxu0 0.0
    %1727 = vmatprep.mubr.f32.mxu0 0.0
    %1728 = vmatmul.mubr.f32.gmra.mrb[0].mxu0 %v1661
    %v1729 = vpop.f32.mrb[0].mxu0
    %v1730 = vadd.f32 0.0, %v1729
    %v1731 = vpop.f32.mrb[0].mxu0
    %1732 = vdwg.mxu0
    %v1734 = vrot.slane %v1730, 6
    %v1736 = vadd.f32 %v1121, %v1734
    %v1737 = vxor.u32 %v1736, 2147483648
    %v1738 = vmul.f32 %v1737, 1.442695
    %v1739 = vpow.pop %v1738
    %v1740 = vadd.f32 %v1739, 1.0
    %v1741 = vrcp.pop %v1740
    %v1742 = vmul.f32 1.0, %v1741
    %v1743 = vtanh.pop %v1736
    %v1745 = vrot.slane %v1651, 6
    %v1747 = vmul.f32 %v1742, %v1745
    %1749 = vrot.lane.b32.xlu0 %v1743, 64
    %v1750 = vpop.permute.xlu0 %1749
    %v1752 = vmul.f32 %v1742, %v1750
    %1754 = vrot.lane.b32.xlu0 %v1752, 32
    %v1755 = vpop.permute.xlu0 %1754
    %v1757 = vadd.f32 %v1747, %v1755
    %v1758 = vtanh.pop %v1757
    %1760 = vrot.lane.b32.xlu0 %v1758, 64
    %v1761 = vpop.permute.xlu0 %1760
    %v1763 = vmul.f32 %v1742, %v1761
    %v1765 = vrot.slane %v1763, 2
    %1766 = vrot.lane.b32.xlu0 %v1765, 32
    %v1767 = vpop.permute.xlu0 %1766
    %v1768 = vsel %vm144, %v1767, 0
    %1770 = vmatprep.subr.mxu0 0.0
    %1771 = vmatpush1.msra.mxu0 %v1124
    %1772 = vmatprep.subr.mxu0 0.0
    %1773 = vmatpush1.msra.mxu0 %v1125
    %1774 = vmatprep.subr.mxu0 0.0
    %1775 = vmatpush1.msra.mxu0 %v1126
    %1776 = vmatprep.subr.mxu0 0.0
    %1777 = vmatpush1.msra.mxu0 %v1127
    %1778 = vmatprep.subr.mxu0 0.0
    %1779 = vmatpush1.msra.mxu0 0.0
    %1780 = vmatprep.subr.mxu0 0.0
    %1781 = vmatpush1.msra.mxu0 0.0
    %1782 = vmatprep.subr.mxu0 0.0
    %1783 = vmatpush1.msra.mxu0 0.0
    %1784 = vmatprep.subr.mxu0 0.0
    %1785 = vmatpush1.msra.mxu0 0.0
    %1786 = vmatprep.subr.mxu0 0.0
    %1787 = vmatpush1.msra.mxu0 0.0
    %1788 = vmatprep.subr.mxu0 0.0
    %1789 = vmatpush1.msra.mxu0 0.0
    %1790 = vmatprep.subr.mxu0 0.0
    %1791 = vmatpush1.msra.mxu0 0.0
    %1792 = vmatprep.subr.mxu0 0.0
    %1793 = vmatpush1.msra.mxu0 0.0
    %1794 = vmatprep.subr.mxu0 0.0
    %1795 = vmatpush1.msra.mxu0 0.0
    %1796 = vmatprep.subr.mxu0 0.0
    %1797 = vmatpush1.msra.mxu0 0.0
    %1798 = vmatprep.subr.mxu0 0.0
    %1799 = vmatpush1.msra.mxu0 0.0
    %1800 = vmatprep.subr.mxu0 0.0
    %1801 = vmatpush1.msra.mxu0 0.0
    %1802 = vmatprep.subr.mxu0 0.0
    %1803 = vmatpush1.msra.mxu0 0.0
    %1804 = vmatprep.subr.mxu0 0.0
    %1805 = vmatpush1.msra.mxu0 0.0
    %1806 = vmatprep.subr.mxu0 0.0
    %1807 = vmatpush1.msra.mxu0 0.0
    %1808 = vmatprep.subr.mxu0 0.0
    %1809 = vmatpush1.msra.mxu0 0.0
    %1810 = vmatprep.subr.mxu0 0.0
    %1811 = vmatpush1.msra.mxu0 0.0
    %1812 = vmatprep.subr.mxu0 0.0
    %1813 = vmatpush1.msra.mxu0 0.0
    %1814 = vmatprep.subr.mxu0 0.0
    %1815 = vmatpush1.msra.mxu0 0.0
    %1816 = vmatprep.subr.mxu0 0.0
    %1817 = vmatpush1.msra.mxu0 0.0
    %1818 = vmatprep.subr.mxu0 0.0
    %1819 = vmatpush1.msra.mxu0 0.0
    %1820 = vmatprep.subr.mxu0 0.0
    %1821 = vmatpush1.msra.mxu0 0.0
    %1822 = vmatprep.subr.mxu0 0.0
    %1823 = vmatpush1.msra.mxu0 0.0
    %1824 = vmatprep.subr.mxu0 0.0
    %1825 = vmatpush1.msra.mxu0 0.0
    %1826 = vmatprep.subr.mxu0 0.0
    %1827 = vmatpush1.msra.mxu0 0.0
    %1828 = vmatprep.subr.mxu0 0.0
    %1829 = vmatpush1.msra.mxu0 0.0
    %1830 = vmatprep.subr.mxu0 0.0
    %1831 = vmatpush1.msra.mxu0 0.0
    %1832 = vmatprep.subr.mxu0 0.0
    %1833 = vmatpush1.msra.mxu0 0.0
    %1834 = vmatprep.mubr.f32.mxu0 0.0
    %1835 = vmatmul.mubr.f32.gmra.mrb[0].mxu0 %v1768
    %v1836 = vpop.f32.mrb[0].mxu0
    %v1837 = vadd.f32 0.0, %v1836
    %v1838 = vpop.f32.mrb[0].mxu0
    %1839 = vdwg.mxu0
    %v1841 = vrot.slane %v1837, 4
    %v1843 = vadd.f32 %v1121, %v1841
    %v1844 = vxor.u32 %v1843, 2147483648
    %v1845 = vmul.f32 %v1844, 1.442695
    %v1846 = vpow.pop %v1845
    %v1847 = vadd.f32 %v1846, 1.0
    %v1848 = vrcp.pop %v1847
    %v1849 = vmul.f32 1.0, %v1848
    %v1850 = vtanh.pop %v1843
    %v1852 = vrot.slane %v1757, 6
    %v1854 = vmul.f32 %v1849, %v1852
    %1856 = vrot.lane.b32.xlu0 %v1850, 64
    %v1857 = vpop.permute.xlu0 %1856
    %v1859 = vmul.f32 %v1849, %v1857
    %1861 = vrot.lane.b32.xlu0 %v1859, 32
    %v1862 = vpop.permute.xlu0 %1861
    %v1864 = vadd.f32 %v1854, %v1862
    %v1865 = vtanh.pop %v1864
    %1867 = vrot.lane.b32.xlu0 %v1865, 64
    %v1868 = vpop.permute.xlu0 %1867
    %v1870 = vmul.f32 %v1849, %v1868
    %v1872 = vrot.slane %v1870, 4
    %1873 = vrot.lane.b32.xlu0 %v1872, 32
    %v1874 = vpop.permute.xlu0 %1873
    %v1875 = vsel %vm144, %v1874, 0
    %1877 = vmatprep.subr.mxu0 0.0
    %1878 = vmatpush1.msra.mxu0 %v1124
    %1879 = vmatprep.subr.mxu0 0.0
    %1880 = vmatpush1.msra.mxu0 %v1125
    %1881 = vmatprep.subr.mxu0 0.0
    %1882 = vmatpush1.msra.mxu0 %v1126
    %1883 = vmatprep.subr.mxu0 0.0
    %1884 = vmatpush1.msra.mxu0 %v1127
    %1885 = vmatprep.subr.mxu0 0.0
    %1886 = vmatpush1.msra.mxu0 0.0
    %1887 = vmatprep.subr.mxu0 0.0
    %1888 = vmatpush1.msra.mxu0 0.0
    %1889 = vmatprep.subr.mxu0 0.0
    %1890 = vmatpush1.msra.mxu0 0.0
    %1891 = vmatprep.subr.mxu0 0.0
    %1892 = vmatpush1.msra.mxu0 0.0
    %1893 = vmatprep.subr.mxu0 0.0
    %1894 = vmatpush1.msra.mxu0 0.0
    %1895 = vmatprep.subr.mxu0 0.0
    %1896 = vmatpush1.msra.mxu0 0.0
    %1897 = vmatprep.subr.mxu0 0.0
    %1898 = vmatpush1.msra.mxu0 0.0
    %1899 = vmatprep.subr.mxu0 0.0
    %1900 = vmatpush1.msra.mxu0 0.0
    %1901 = vmatprep.subr.mxu0 0.0
    %1902 = vmatpush1.msra.mxu0 0.0
    %1903 = vmatprep.subr.mxu0 0.0
    %1904 = vmatpush1.msra.mxu0 0.0
    %1905 = vmatprep.subr.mxu0 0.0
    %1906 = vmatpush1.msra.mxu0 0.0
    %1907 = vmatprep.subr.mxu0 0.0
    %1908 = vmatpush1.msra.mxu0 0.0
    %1909 = vmatprep.subr.mxu0 0.0
    %1910 = vmatpush1.msra.mxu0 0.0
    %1911 = vmatprep.subr.mxu0 0.0
    %1912 = vmatpush1.msra.mxu0 0.0
    %1913 = vmatprep.subr.mxu0 0.0
    %1914 = vmatpush1.msra.mxu0 0.0
    %1915 = vmatprep.subr.mxu0 0.0
    %1916 = vmatpush1.msra.mxu0 0.0
    %1917 = vmatprep.subr.mxu0 0.0
    %1918 = vmatpush1.msra.mxu0 0.0
    %1919 = vmatprep.subr.mxu0 0.0
    %1920 = vmatpush1.msra.mxu0 0.0
    %1921 = vmatprep.subr.mxu0 0.0
    %1922 = vmatpush1.msra.mxu0 0.0
    %1923 = vmatprep.subr.mxu0 0.0
    %1924 = vmatpush1.msra.mxu0 0.0
    %1925 = vmatprep.subr.mxu0 0.0
    %1926 = vmatpush1.msra.mxu0 0.0
    %1927 = vmatprep.subr.mxu0 0.0
    %1928 = vmatpush1.msra.mxu0 0.0
    %1929 = vmatprep.subr.mxu0 0.0
    %1930 = vmatpush1.msra.mxu0 0.0
    %1931 = vmatprep.subr.mxu0 0.0
    %1932 = vmatpush1.msra.mxu0 0.0
    %1933 = vmatprep.subr.mxu0 0.0
    %1934 = vmatpush1.msra.mxu0 0.0
    %1935 = vmatprep.subr.mxu0 0.0
    %1936 = vmatpush1.msra.mxu0 0.0
    %1937 = vmatprep.subr.mxu0 0.0
    %1938 = vmatpush1.msra.mxu0 0.0
    %1939 = vmatprep.subr.mxu0 0.0
    %1940 = vmatpush1.msra.mxu0 0.0
    %1941 = vmatprep.mubr.f32.mxu0 0.0
    %1942 = vmatmul.mubr.f32.gmra.mrb[0].mxu0 %v1875
    %v1943 = vpop.f32.mrb[0].mxu0
    %v1944 = vadd.f32 0.0, %v1943
    %v1945 = vpop.f32.mrb[0].mxu0
    %1946 = vdwg.mxu0
    %v1948 = vrot.slane %v1944, 2
    %v1950 = vadd.f32 %v1121, %v1948
    %v1951 = vxor.u32 %v1950, 2147483648
    %v1952 = vmul.f32 %v1951, 1.442695
    %v1953 = vpow.pop %v1952
    %v1954 = vadd.f32 %v1953, 1.0
    %v1955 = vrcp.pop %v1954
    %v1956 = vmul.f32 1.0, %v1955
    %v1957 = vtanh.pop %v1950
    %v1959 = vrot.slane %v1864, 6
    %v1961 = vmul.f32 %v1956, %v1959
    %1963 = vrot.lane.b32.xlu0 %v1957, 64
    %v1964 = vpop.permute.xlu0 %1963
    %v1966 = vmul.f32 %v1956, %v1964
    %1968 = vrot.lane.b32.xlu0 %v1966, 32
    %v1969 = vpop.permute.xlu0 %1968
    %v1971 = vadd.f32 %v1961, %v1969
    %v1972 = vtanh.pop %v1971
    %1974 = vrot.lane.b32.xlu0 %v1972, 64
    %v1975 = vpop.permute.xlu0 %1974
    %v1977 = vmul.f32 %v1956, %v1975
    %1979 = vrot.lane.b32.xlu0 %v1977, 32
    %v1980 = vpop.permute.xlu0 %1979
    %s1982 = scalar_lea.vmem [#allocation4], 2
    %1983 = vst.msk [vmem:[%s1982 - $0x6] sm:$0xc0] %vm584, %v1980
    %1985 = vrot.lane.b32.xlu0 %v1971, 96
    %v1986 = vpop.permute.xlu0 %1985
    %s1988 = scalar_lea.vmem [#allocation6], 2
    %1989 = vst.msk [vmem:[%s1988 - $0x6] sm:$0xc0] %vm584, %v1986
    %v1990 = vld [vmem:[%s9] sm:$0xff]
    %v1991 = vld [vmem:[%s9 + $0x8] sm:$0xff]
    %v1992 = vld [vmem:[%s9 + $0x10] sm:$0xff]
    %v1993 = vld [vmem:[%s9 + $0x18] sm:$0xff]
    %v1994 = vld [vmem:[#allocation3] sm:$0x1]
    %v1996 = vlaneseq
    %v1997 = vshrl.u32 %v1996, 7
    %v1998 = vsub.s32 0, %v1997
    %v1999 = vrot.slane %v1994, %v1998
    %v2001 = vrot.slane %v1977, 6
    %2002 = vrot.lane.b32.xlu0 %v2001, 32
    %v2003 = vpop.permute.xlu0 %2002
    %v2004 = vsel %vm144, %v2003, 0
    %2006 = vmatprep.subr.mxu0 0.0
    %2007 = vmatpush1.msra.mxu0 %v1990
    %2008 = vmatprep.subr.mxu0 0.0
    %2009 = vmatpush1.msra.mxu0 %v1991
    %2010 = vmatprep.subr.mxu0 0.0
    %2011 = vmatpush1.msra.mxu0 %v1992
    %2012 = vmatprep.subr.mxu0 0.0
    %2013 = vmatpush1.msra.mxu0 %v1993
    %2014 = vmatprep.subr.mxu0 0.0
    %2015 = vmatpush1.msra.mxu0 0.0
    %2016 = vmatprep.subr.mxu0 0.0
    %2017 = vmatpush1.msra.mxu0 0.0
    %2018 = vmatprep.subr.mxu0 0.0
    %2019 = vmatpush1.msra.mxu0 0.0
    %2020 = vmatprep.subr.mxu0 0.0
    %2021 = vmatpush1.msra.mxu0 0.0
    %2022 = vmatprep.subr.mxu0 0.0
    %2023 = vmatpush1.msra.mxu0 0.0
    %2024 = vmatprep.subr.mxu0 0.0
    %2025 = vmatpush1.msra.mxu0 0.0
    %2026 = vmatprep.subr.mxu0 0.0
    %2027 = vmatpush1.msra.mxu0 0.0
    %2028 = vmatprep.subr.mxu0 0.0
    %2029 = vmatpush1.msra.mxu0 0.0
    %2030 = vmatprep.subr.mxu0 0.0
    %2031 = vmatpush1.msra.mxu0 0.0
    %2032 = vmatprep.subr.mxu0 0.0
    %2033 = vmatpush1.msra.mxu0 0.0
    %2034 = vmatprep.subr.mxu0 0.0
    %2035 = vmatpush1.msra.mxu0 0.0
    %2036 = vmatprep.subr.mxu0 0.0
    %2037 = vmatpush1.msra.mxu0 0.0
    %2038 = vmatprep.subr.mxu0 0.0
    %2039 = vmatpush1.msra.mxu0 0.0
    %2040 = vmatprep.subr.mxu0 0.0
    %2041 = vmatpush1.msra.mxu0 0.0
    %2042 = vmatprep.subr.mxu0 0.0
    %2043 = vmatpush1.msra.mxu0 0.0
    %2044 = vmatprep.subr.mxu0 0.0
    %2045 = vmatpush1.msra.mxu0 0.0
    %2046 = vmatprep.subr.mxu0 0.0
    %2047 = vmatpush1.msra.mxu0 0.0
    %2048 = vmatprep.subr.mxu0 0.0
    %2049 = vmatpush1.msra.mxu0 0.0
    %2050 = vmatprep.subr.mxu0 0.0
    %2051 = vmatpush1.msra.mxu0 0.0
    %2052 = vmatprep.subr.mxu0 0.0
    %2053 = vmatpush1.msra.mxu0 0.0
    %2054 = vmatprep.subr.mxu0 0.0
    %2055 = vmatpush1.msra.mxu0 0.0
    %2056 = vmatprep.subr.mxu0 0.0
    %2057 = vmatpush1.msra.mxu0 0.0
    %2058 = vmatprep.subr.mxu0 0.0
    %2059 = vmatpush1.msra.mxu0 0.0
    %2060 = vmatprep.subr.mxu0 0.0
    %2061 = vmatpush1.msra.mxu0 0.0
    %2062 = vmatprep.subr.mxu0 0.0
    %2063 = vmatpush1.msra.mxu0 0.0
    %2064 = vmatprep.subr.mxu0 0.0
    %2065 = vmatpush1.msra.mxu0 0.0
    %2066 = vmatprep.subr.mxu0 0.0
    %2067 = vmatpush1.msra.mxu0 0.0
    %2068 = vmatprep.subr.mxu0 0.0
    %2069 = vmatpush1.msra.mxu0 0.0
    %2070 = vmatprep.mubr.f32.mxu0 0.0
    %2071 = vmatmul.mubr.f32.gmra.mrb[0].mxu0 %v2004
    %v2072 = vpop.f32.mrb[0].mxu0
    %v2073 = vadd.f32 %v1999, %v2072
    %v2074 = vpop.f32.mrb[0].mxu0
    %2075 = vdwg.mxu0
    %v2076 = vxor.u32 %v2073, 2147483648
    %v2077 = vmul.f32 %v2076, 1.442695
    %v2078 = vpow.pop %v2077
    %v2079 = vadd.f32 %v2078, 1.0
    %v2080 = vrcp.pop %v2079
    %v2081 = vmul.f32 1.0, %v2080
    %vm2082 = vcmask 1024
    %2083 = vst.msk [vmem:[%s11] sm:$0x3] %vm2082, %v2081
    // Predicated region
    $region46: #{sentiment_lstm_forward.1} parent=1 // pred_check
      _
    $region47: #{sentiment_lstm_forward.1} parent=1 // pred_check_branch
      %2085 = sbr.rel (0) target = $region49
    $region48: #{sentiment_lstm_forward.1} parent=1 // pred_region
      _
    $region49: #{sentiment_lstm_forward.1} parent=1 // pred_fallthru
      _
    // Predicated region
    $region50: #{sentiment_lstm_forward.1} parent=1 // pred_check
      _
    $region51: #{sentiment_lstm_forward.1} parent=1 // pred_check_branch
      %2087 = sbr.rel (0) target = $region53
    $region52: #{sentiment_lstm_forward.1} parent=1 // pred_region
      %s2089 = ssub.s32 64, 64
      %2090 = vsyncadd [#allocation5], %s2089
      %s2091 = sshll.u32 [#allocation4], 4
      %s2092 = int_to_ptr.vmem [resolvable:$true] %s2091
      %2097 = dma.vmem_to_hbm [thread:$0]  %s2092, 64, %s12, [#allocation5], 32, 32, 2
    $region53: #{sentiment_lstm_forward.1} parent=1 // pred_fallthru
      _
    // Predicated region
    $region54: #{sentiment_lstm_forward.1} parent=1 // pred_check
      _
    $region55: #{sentiment_lstm_forward.1} parent=1 // pred_check_branch
      %2099 = sbr.rel (0) target = $region57
    $region56: #{sentiment_lstm_forward.1} parent=1 // pred_region
      %s2101 = ssub.s32 64, 64
      %2102 = vsyncadd [#allocation7], %s2101
      %s2103 = sshll.u32 [#allocation6], 4
      %s2104 = int_to_ptr.vmem [resolvable:$true] %s2103
      %2109 = dma.vmem_to_hbm [thread:$0]  %s2104, 64, %s13, [#allocation7], 32, 32, 2
    $region57: #{sentiment_lstm_forward.1} parent=1 // pred_fallthru
      _
    // Predicated region
    $region58: #{sentiment_lstm_forward.1} parent=1 // pred_check
      _
    $region59: #{sentiment_lstm_forward.1} parent=1 // pred_check_branch
      %2111 = sbr.rel (0) target = $region61
    $region60: #{sentiment_lstm_forward.1} parent=1 // pred_region
      _
    $region61: #{sentiment_lstm_forward.1} parent=1 // pred_fallthru
      _
    // Predicated region
    $region62: #{sentiment_lstm_forward.1} parent=1 // pred_check
      _
    $region63: #{sentiment_lstm_forward.1} parent=1 // pred_check_branch
      %2113 = sbr.rel (0) target = $region65
    $region64: #{sentiment_lstm_forward.1} parent=1 // pred_region
      %2114 = dma.done [#allocation5], 64
    $region65: #{sentiment_lstm_forward.1} parent=1 // pred_fallthru
      _
    // Predicated region
    $region66: #{sentiment_lstm_forward.1} parent=1 // pred_check
      _
    $region67: #{sentiment_lstm_forward.1} parent=1 // pred_check_branch
      %2116 = sbr.rel (0) target = $region69
    $region68: #{sentiment_lstm_forward.1} parent=1 // pred_region
      %2117 = dma.done [#allocation7], 64
    $region69: #{sentiment_lstm_forward.1} parent=1 // pred_fallthru
      _
    %2118 = vsyncpa [#allocation5], 1
    %2119 = vsyncpa [#allocation7], 1

</llo_original>
